<compile_context>
chip_gen: v6e
topology: v6e:2x2x1
jax: 0.10.0
libtpu: 0.0.40
codegen_flags: <defaults>
</compile_context>

<pallas_src>
import jax
import jax.numpy as jnp
from jax.experimental import pallas as pl
from jax.experimental.pallas import tpu as pltpu


def _se_conv1x1_kernel(x_ref, gate_ref, w_ref, o_ref):
    # x_ref:    (C_in, M)     activations, channels on sublanes, pixels on lanes
    # gate_ref: (1, C_in)     pre-sigmoid SE gate
    # w_ref:    (C_out, C_in) 1x1-conv weight (original OIHW order, squeezed)
    # o_ref:    (C_out, M)    output block
    scale = jax.nn.sigmoid(gate_ref[...])          # (1, C_in)      EUP
    w_s = w_ref[...] * scale                       # (C_out, C_in)  gate folded into the small operand (VPU)
    o_ref[...] = jnp.dot(                          # MXU, f32 accumulation
        w_s, x_ref[...], preferred_element_type=jnp.float32
    ).astype(o_ref.dtype)


def se_scale_conv1x1(gate_nc11, x_nchw, weight_oihw):
    """out = Conv1x1(x * sigmoid(gate)), no bias. NCHW in / NCHW out."""
    n, c_in, h, w_sp = x_nchw.shape
    c_out = weight_oihw.shape[0]
    assert gate_nc11.shape == (n, c_in, 1, 1)
    assert weight_oihw.shape == (c_out, c_in, 1, 1)
    assert n == 1, "kernel assumes batch=1 (matches the captured module inputs)"

    m = h * w_sp
    # Channel-major views: pure reshapes of contiguous tensors, no HBM traffic.
    x_cm = x_nchw.reshape(c_in, m)                 # (C_in, M)
    gate = gate_nc11.reshape(1, c_in)              # (1, C_in)
    w_mat = weight_oihw.reshape(c_out, c_in)       # (C_out, C_in)

    itemsize = jnp.dtype(x_nchw.dtype).itemsize
    cost = pl.CostEstimate(
        flops=2 * c_out * c_in * m,
        transcendentals=c_in,                      # sigmoid over the gate
        bytes_accessed=itemsize * (c_in * m + c_out * c_in + c_in + c_out * m),
    )

    out_cm = pl.pallas_call(
        _se_conv1x1_kernel,
        out_shape=jax.ShapeDtypeStruct((c_out, m), x_nchw.dtype),
        # Single invocation, everything resident in VMEM: one contiguous DMA
        # per operand, no grid-step overhead, no masking, no accumulator init.
        in_specs=[
            pl.BlockSpec(memory_space=pltpu.MemorySpace.VMEM),   # x   (C_in, M)
            pl.BlockSpec(memory_space=pltpu.MemorySpace.VMEM),   # gate (1, C_in)
            pl.BlockSpec(memory_space=pltpu.MemorySpace.VMEM),   # w   (C_out, C_in)
        ],
        out_specs=pl.BlockSpec(memory_space=pltpu.MemorySpace.VMEM),
        cost_estimate=cost,
    )(x_cm, gate, w_mat)

    # (C_out, M) -> (1, C_out, H, W): pure reshape, no transpose.
    return out_cm.reshape(n, c_out, h, w_sp)


if __name__ == "__main__":
    key = jax.random.PRNGKey(0)
    k_x, k_g, k_w = jax.random.split(key, 3)

    N, C_IN, C_OUT, H, W = 1, 1200, 200, 14, 14

    # Inputs matching the module's forward signature (x452 gate, x448 activations).
    x448 = jax.random.normal(k_x, (N, C_IN, H, W), dtype=jnp.float32)
    x452 = jax.random.normal(k_g, (N, C_IN, 1, 1), dtype=jnp.float32)

    # Deterministic Conv2d(1200, 200, 1, bias=False) weight (kaiming-uniform-like scale).
    fan_in = C_IN  # 1x1 kernel
    bound = 1.0 / jnp.sqrt(fan_in)
    conv_w = jax.random.uniform(
        k_w, (C_OUT, C_IN, 1, 1), minval=-bound, maxval=bound, dtype=jnp.float32
    )

    out = jax.block_until_ready(se_scale_conv1x1(x452, x448, conv_w))
    assert out.shape == (N, C_OUT, H, W), out.shape

    # Reference check in plain JAX (f32).
    ref = jnp.einsum(
        "nchw,oc->nohw",
        x448 * jax.nn.sigmoid(x452),
        conv_w.reshape(C_OUT, C_IN),
    )
    err = jnp.max(jnp.abs(out - ref))
    # f32 operands, f32 accumulation over K=1200; tolerance leaves headroom for
    # MXU multi-pass rounding on generations that decompose f32 matmuls.
    assert err < 2e-2, float(err)

    print("KERNEL_OK")
</pallas_src>

<mosaic_0001>
module attributes {stable_mosaic.version = 11 : i64} {
  func.func @_se_conv1x1_kernel(%arg0: memref<1200x196xf32, #tpu.memory_space<vmem>>, %arg1: memref<1x1200xf32, #tpu.memory_space<vmem>>, %arg2: memref<200x1200xf32, #tpu.memory_space<vmem>>, %arg3: memref<200x196xf32, #tpu.memory_space<vmem>>) attributes {dimension_semantics = [], scalar_prefetch = 0 : i64, scratch_operands = 0 : i64, tpu.core_type = #tpu.core_type<tc>} {
    %c0 = arith.constant 0 : index
    %c0_0 = arith.constant 0 : index
    %0 = vector.load %arg1[%c0, %c0_0] : memref<1x1200xf32, #tpu.memory_space<vmem>>, vector<1x1200xf32>
    %1 = arith.negf %0 : vector<1x1200xf32>
    %2 = math.exp %1 : vector<1x1200xf32>
    %cst = arith.constant 1.000000e+00 : f32
    %3 = vector.broadcast %cst : f32 to vector<1x1200xf32>
    %4 = arith.addf %3, %2 : vector<1x1200xf32>
    %5 = arith.divf %3, %4 : vector<1x1200xf32>
    %c0_1 = arith.constant 0 : index
    %c0_2 = arith.constant 0 : index
    %6 = vector.load %arg2[%c0_1, %c0_2] : memref<200x1200xf32, #tpu.memory_space<vmem>>, vector<200x1200xf32>
    %7 = vector.broadcast %5 : vector<1x1200xf32> to vector<200x1200xf32>
    %8 = arith.mulf %6, %7 : vector<200x1200xf32>
    %c0_3 = arith.constant 0 : index
    %c0_4 = arith.constant 0 : index
    %9 = vector.load %arg0[%c0_3, %c0_4] : memref<1200x196xf32, #tpu.memory_space<vmem>>, vector<1200x196xf32>
    %cst_5 = arith.constant dense<0.000000e+00> : vector<200x196xf32>
    %10 = tpu.matmul %8, %9, %cst_5 {dimension_numbers = #tpu.dot_dimension_numbers<[1], [0], [0], [1], [0, 0, 1, 1], [], []>} : vector<200x1200xf32>, vector<1200x196xf32>, vector<200x196xf32> -> vector<200x196xf32>
    %c0_6 = arith.constant 0 : index
    %c0_7 = arith.constant 0 : index
    %11 = vector.load %arg3[%c0_6, %c0_7] : memref<200x196xf32, #tpu.memory_space<vmem>>, vector<200x196xf32>
    tpu.vector_store %arg3[%c0_6, %c0_7], %10 {strides = array<i32>} : memref<200x196xf32, #tpu.memory_space<vmem>>, vector<200x196xf32>,
    return
  }
}

</mosaic_0001>

<llo_original>
// kernel: tpu_custom_call.1
$region0: #{tpu_custom_call.1}
  #allocation0 [shape = 'u32[]', space=smem, size = 0x4, offset = 0x4, fixed_abs, tag = 'smem constant byte address 0x4 - core index']
  #allocation1 [shape = 'u32[144,128]{1,0:T(1,128)}', space=vmem, size = 0x12000, scoped, tag = 'internal scratch']
  %s0 = inlined_call_operand.vmem [shape: f32[1200,196], index: 0, kind: input, shape index: {}]
  %s1 = inlined_call_operand.vmem [shape: f32[1,1200], index: 1, kind: input, shape index: {}]
  %s2 = inlined_call_operand.vmem [shape: f32[200,1200], index: 2, kind: input, shape index: {}]
  %s3 = inlined_call_operand.hbm [shape: f32[200,196], index: 3, kind: output, shape index: {}]
  %s4 = sld [smem:[#allocation0]]
  $region22: #{tpu_custom_call.1} parent=0
    _
  %s6 = ssub.s32 1, %s4
  %s7 = scalar_select 0, %s6, %s4
  $region1: #{tpu_custom_call.1} parent=0
    #allocation2 [shape = 'u8[204800]{0}', space=vmem, size = 0x32000, scoped, tag = 'output window, operand 0, single buffered']
    #allocation3 [shape = 's32[1]{0}', space=sflag, size = 0x4, scoped, tag = 'scoped memory for tpu_custom_call.1']
    %8 = vsyncpa [#allocation3], 0
    // Predicated region
    $region2: #{tpu_custom_call.1} parent=1 // pred_check
      _
    $region3: #{tpu_custom_call.1} parent=1 // pred_check_branch
      %10 = sbr.rel (0) target = $region5
    $region4: #{tpu_custom_call.1} parent=1 // pred_region
      _
    $region5: #{tpu_custom_call.1} parent=1 // pred_fallthru
      _
    // Predicated region
    $region6: #{tpu_custom_call.1} parent=1 // pred_check
      _
    $region7: #{tpu_custom_call.1} parent=1 // pred_check_branch
      %12 = sbr.rel (0) target = $region9
    $region8: #{tpu_custom_call.1} parent=1 // pred_region
      _
    $region9: #{tpu_custom_call.1} parent=1 // pred_fallthru
      _
    // Predicated region
    $region10: #{tpu_custom_call.1} parent=1 // pred_check
      _
    $region11: #{tpu_custom_call.1} parent=1 // pred_check_branch
      %14 = sbr.rel (0) target = $region13
    $region12: #{tpu_custom_call.1} parent=1 // pred_region
      _
    $region13: #{tpu_custom_call.1} parent=1 // pred_fallthru
      _
    %v15 = vld [vmem:[%s1] sm:$0xff]
    %v16 = vld [vmem:[%s1 + $0x8] sm:$0x3]
    %v17 = vxor.u32 %v15, 2147483648
    %v18 = vxor.u32 %v16, 2147483648
    %v19 = vmul.f32 %v17, 1.442695
    %v20 = vpow.pop %v19
    %v21 = vmul.f32 %v18, 1.442695
    %v22 = vpow.pop %v21
    %v23 = vadd.f32 %v20, 1.0
    %v24 = vadd.f32 %v22, 1.0
    %v25 = vrcp.pop %v23
    %v26 = vmul.f32 1.0, %v25
    %v27 = vrcp.pop %v24
    %v28 = vmul.f32 1.0, %v27
    %v29 = vld [vmem:[%s2] sm:$0xff]
    %v30 = vld [vmem:[%s2 + $0x8] sm:$0xff]
    %v31 = vld [vmem:[%s2 + $0x10] sm:$0xff]
    %v32 = vld [vmem:[%s2 + $0x18] sm:$0xff]
    %v33 = vld [vmem:[%s2 + $0x20] sm:$0xff]
    %v34 = vld [vmem:[%s2 + $0x28] sm:$0xff]
    %v35 = vld [vmem:[%s2 + $0x30] sm:$0xff]
    %v36 = vld [vmem:[%s2 + $0x38] sm:$0xff]
    %v37 = vld [vmem:[%s2 + $0x40] sm:$0xff]
    %v38 = vld [vmem:[%s2 + $0x48] sm:$0xff]
    %v39 = vld [vmem:[%s2 + $0x50] sm:$0xff]
    %v40 = vld [vmem:[%s2 + $0x58] sm:$0xff]
    %v41 = vld [vmem:[%s2 + $0x60] sm:$0xff]
    %v42 = vld [vmem:[%s2 + $0x68] sm:$0xff]
    %v43 = vld [vmem:[%s2 + $0x70] sm:$0xff]
    %v44 = vld [vmem:[%s2 + $0x78] sm:$0xff]
    %v45 = vld [vmem:[%s2 + $0x80] sm:$0xff]
    %v46 = vld [vmem:[%s2 + $0x88] sm:$0xff]
    %v47 = vld [vmem:[%s2 + $0x90] sm:$0xff]
    %v48 = vld [vmem:[%s2 + $0x98] sm:$0xff]
    %v49 = vld [vmem:[%s2 + $0xa0] sm:$0xff]
    %v50 = vld [vmem:[%s2 + $0xa8] sm:$0xff]
    %v51 = vld [vmem:[%s2 + $0xb0] sm:$0xff]
    %v52 = vld [vmem:[%s2 + $0xb8] sm:$0xff]
    %v53 = vld [vmem:[%s2 + $0xc0] sm:$0xff]
    %v54 = vld [vmem:[%s2 + $0xc8] sm:$0xff]
    %v55 = vld [vmem:[%s2 + $0xd0] sm:$0xff]
    %v56 = vld [vmem:[%s2 + $0xd8] sm:$0xff]
    %v57 = vld [vmem:[%s2 + $0xe0] sm:$0xff]
    %v58 = vld [vmem:[%s2 + $0xe8] sm:$0xff]
    %v59 = vld [vmem:[%s2 + $0xf0] sm:$0xff]
    %v60 = vld [vmem:[%s2 + $0xf8] sm:$0xff]
    %v61 = vld [vmem:[%s2 + $0x100] sm:$0xff]
    %v62 = vld [vmem:[%s2 + $0x108] sm:$0xff]
    %v63 = vld [vmem:[%s2 + $0x110] sm:$0xff]
    %v64 = vld [vmem:[%s2 + $0x118] sm:$0xff]
    %v65 = vld [vmem:[%s2 + $0x120] sm:$0xff]
    %v66 = vld [vmem:[%s2 + $0x128] sm:$0xff]
    %v67 = vld [vmem:[%s2 + $0x130] sm:$0xff]
    %v68 = vld [vmem:[%s2 + $0x138] sm:$0xff]
    %v69 = vld [vmem:[%s2 + $0x140] sm:$0xff]
    %v70 = vld [vmem:[%s2 + $0x148] sm:$0xff]
    %v71 = vld [vmem:[%s2 + $0x150] sm:$0xff]
    %v72 = vld [vmem:[%s2 + $0x158] sm:$0xff]
    %v73 = vld [vmem:[%s2 + $0x160] sm:$0xff]
    %v74 = vld [vmem:[%s2 + $0x168] sm:$0xff]
    %v75 = vld [vmem:[%s2 + $0x170] sm:$0xff]
    %v76 = vld [vmem:[%s2 + $0x178] sm:$0xff]
    %v77 = vld [vmem:[%s2 + $0x180] sm:$0xff]
    %v78 = vld [vmem:[%s2 + $0x188] sm:$0xff]
    %v79 = vld [vmem:[%s2 + $0x190] sm:$0xff]
    %v80 = vld [vmem:[%s2 + $0x198] sm:$0xff]
    %v81 = vld [vmem:[%s2 + $0x1a0] sm:$0xff]
    %v82 = vld [vmem:[%s2 + $0x1a8] sm:$0xff]
    %v83 = vld [vmem:[%s2 + $0x1b0] sm:$0xff]
    %v84 = vld [vmem:[%s2 + $0x1b8] sm:$0xff]
    %v85 = vld [vmem:[%s2 + $0x1c0] sm:$0xff]
    %v86 = vld [vmem:[%s2 + $0x1c8] sm:$0xff]
    %v87 = vld [vmem:[%s2 + $0x1d0] sm:$0xff]
    %v88 = vld [vmem:[%s2 + $0x1d8] sm:$0xff]
    %v89 = vld [vmem:[%s2 + $0x1e0] sm:$0xff]
    %v90 = vld [vmem:[%s2 + $0x1e8] sm:$0xff]
    %v91 = vld [vmem:[%s2 + $0x1f0] sm:$0xff]
    %v92 = vld [vmem:[%s2 + $0x1f8] sm:$0xff]
    %v93 = vld [vmem:[%s2 + $0x200] sm:$0xff]
    %v94 = vld [vmem:[%s2 + $0x208] sm:$0xff]
    %v95 = vld [vmem:[%s2 + $0x210] sm:$0xff]
    %v96 = vld [vmem:[%s2 + $0x218] sm:$0xff]
    %v97 = vld [vmem:[%s2 + $0x220] sm:$0xff]
    %v98 = vld [vmem:[%s2 + $0x228] sm:$0xff]
    %v99 = vld [vmem:[%s2 + $0x230] sm:$0xff]
    %v100 = vld [vmem:[%s2 + $0x238] sm:$0xff]
    %v101 = vld [vmem:[%s2 + $0x240] sm:$0xff]
    %v102 = vld [vmem:[%s2 + $0x248] sm:$0xff]
    %v103 = vld [vmem:[%s2 + $0x250] sm:$0xff]
    %v104 = vld [vmem:[%s2 + $0x258] sm:$0xff]
    %v105 = vld [vmem:[%s2 + $0x260] sm:$0xff]
    %v106 = vld [vmem:[%s2 + $0x268] sm:$0xff]
    %v107 = vld [vmem:[%s2 + $0x270] sm:$0xff]
    %v108 = vld [vmem:[%s2 + $0x278] sm:$0xff]
    %v109 = vld [vmem:[%s2 + $0x280] sm:$0xff]
    %v110 = vld [vmem:[%s2 + $0x288] sm:$0xff]
    %v111 = vld [vmem:[%s2 + $0x290] sm:$0xff]
    %v112 = vld [vmem:[%s2 + $0x298] sm:$0xff]
    %v113 = vld [vmem:[%s2 + $0x2a0] sm:$0xff]
    %v114 = vld [vmem:[%s2 + $0x2a8] sm:$0xff]
    %v115 = vld [vmem:[%s2 + $0x2b0] sm:$0xff]
    %v116 = vld [vmem:[%s2 + $0x2b8] sm:$0xff]
    %v117 = vld [vmem:[%s2 + $0x2c0] sm:$0xff]
    %v118 = vld [vmem:[%s2 + $0x2c8] sm:$0xff]
    %v119 = vld [vmem:[%s2 + $0x2d0] sm:$0xff]
    %v120 = vld [vmem:[%s2 + $0x2d8] sm:$0xff]
    %v121 = vld [vmem:[%s2 + $0x2e0] sm:$0xff]
    %v122 = vld [vmem:[%s2 + $0x2e8] sm:$0xff]
    %v123 = vld [vmem:[%s2 + $0x2f0] sm:$0xff]
    %v124 = vld [vmem:[%s2 + $0x2f8] sm:$0xff]
    %v125 = vld [vmem:[%s2 + $0x300] sm:$0xff]
    %v126 = vld [vmem:[%s2 + $0x308] sm:$0xff]
    %v127 = vld [vmem:[%s2 + $0x310] sm:$0xff]
    %v128 = vld [vmem:[%s2 + $0x318] sm:$0xff]
    %v129 = vld [vmem:[%s2 + $0x320] sm:$0xff]
    %v130 = vld [vmem:[%s2 + $0x328] sm:$0xff]
    %v131 = vld [vmem:[%s2 + $0x330] sm:$0xff]
    %v132 = vld [vmem:[%s2 + $0x338] sm:$0xff]
    %v133 = vld [vmem:[%s2 + $0x340] sm:$0xff]
    %v134 = vld [vmem:[%s2 + $0x348] sm:$0xff]
    %v135 = vld [vmem:[%s2 + $0x350] sm:$0xff]
    %v136 = vld [vmem:[%s2 + $0x358] sm:$0xff]
    %v137 = vld [vmem:[%s2 + $0x360] sm:$0xff]
    %v138 = vld [vmem:[%s2 + $0x368] sm:$0xff]
    %v139 = vld [vmem:[%s2 + $0x370] sm:$0xff]
    %v140 = vld [vmem:[%s2 + $0x378] sm:$0xff]
    %v141 = vld [vmem:[%s2 + $0x380] sm:$0xff]
    %v142 = vld [vmem:[%s2 + $0x388] sm:$0xff]
    %v143 = vld [vmem:[%s2 + $0x390] sm:$0xff]
    %v144 = vld [vmem:[%s2 + $0x398] sm:$0xff]
    %v145 = vld [vmem:[%s2 + $0x3a0] sm:$0xff]
    %v146 = vld [vmem:[%s2 + $0x3a8] sm:$0xff]
    %v147 = vld [vmem:[%s2 + $0x3b0] sm:$0xff]
    %v148 = vld [vmem:[%s2 + $0x3b8] sm:$0xff]
    %v149 = vld [vmem:[%s2 + $0x3c0] sm:$0xff]
    %v150 = vld [vmem:[%s2 + $0x3c8] sm:$0xff]
    %v151 = vld [vmem:[%s2 + $0x3d0] sm:$0xff]
    %v152 = vld [vmem:[%s2 + $0x3d8] sm:$0xff]
    %v153 = vld [vmem:[%s2 + $0x3e0] sm:$0xff]
    %v154 = vld [vmem:[%s2 + $0x3e8] sm:$0xff]
    %v155 = vld [vmem:[%s2 + $0x3f0] sm:$0xff]
    %v156 = vld [vmem:[%s2 + $0x3f8] sm:$0xff]
    %v157 = vld [vmem:[%s2 + $0x400] sm:$0xff]
    %v158 = vld [vmem:[%s2 + $0x408] sm:$0xff]
    %v159 = vld [vmem:[%s2 + $0x410] sm:$0xff]
    %v160 = vld [vmem:[%s2 + $0x418] sm:$0xff]
    %v161 = vld [vmem:[%s2 + $0x420] sm:$0xff]
    %v162 = vld [vmem:[%s2 + $0x428] sm:$0xff]
    %v163 = vld [vmem:[%s2 + $0x430] sm:$0xff]
    %v164 = vld [vmem:[%s2 + $0x438] sm:$0xff]
    %v165 = vld [vmem:[%s2 + $0x440] sm:$0xff]
    %v166 = vld [vmem:[%s2 + $0x448] sm:$0xff]
    %v167 = vld [vmem:[%s2 + $0x450] sm:$0xff]
    %v168 = vld [vmem:[%s2 + $0x458] sm:$0xff]
    %v169 = vld [vmem:[%s2 + $0x460] sm:$0xff]
    %v170 = vld [vmem:[%s2 + $0x468] sm:$0xff]
    %v171 = vld [vmem:[%s2 + $0x470] sm:$0xff]
    %v172 = vld [vmem:[%s2 + $0x478] sm:$0xff]
    %v173 = vld [vmem:[%s2 + $0x480] sm:$0xff]
    %v174 = vld [vmem:[%s2 + $0x488] sm:$0xff]
    %v175 = vld [vmem:[%s2 + $0x490] sm:$0xff]
    %v176 = vld [vmem:[%s2 + $0x498] sm:$0xff]
    %v177 = vld [vmem:[%s2 + $0x4a0] sm:$0xff]
    %v178 = vld [vmem:[%s2 + $0x4a8] sm:$0xff]
    %v179 = vld [vmem:[%s2 + $0x4b0] sm:$0xff]
    %v180 = vld [vmem:[%s2 + $0x4b8] sm:$0xff]
    %v181 = vld [vmem:[%s2 + $0x4c0] sm:$0xff]
    %v182 = vld [vmem:[%s2 + $0x4c8] sm:$0xff]
    %v183 = vld [vmem:[%s2 + $0x4d0] sm:$0xff]
    %v184 = vld [vmem:[%s2 + $0x4d8] sm:$0xff]
    %v185 = vld [vmem:[%s2 + $0x4e0] sm:$0xff]
    %v186 = vld [vmem:[%s2 + $0x4e8] sm:$0xff]
    %v187 = vld [vmem:[%s2 + $0x4f0] sm:$0xff]
    %v188 = vld [vmem:[%s2 + $0x4f8] sm:$0xff]
    %v189 = vld [vmem:[%s2 + $0x500] sm:$0xff]
    %v190 = vld [vmem:[%s2 + $0x508] sm:$0xff]
    %v191 = vld [vmem:[%s2 + $0x510] sm:$0xff]
    %v192 = vld [vmem:[%s2 + $0x518] sm:$0xff]
    %v193 = vld [vmem:[%s2 + $0x520] sm:$0xff]
    %v194 = vld [vmem:[%s2 + $0x528] sm:$0xff]
    %v195 = vld [vmem:[%s2 + $0x530] sm:$0xff]
    %v196 = vld [vmem:[%s2 + $0x538] sm:$0xff]
    %v197 = vld [vmem:[%s2 + $0x540] sm:$0xff]
    %v198 = vld [vmem:[%s2 + $0x548] sm:$0xff]
    %v199 = vld [vmem:[%s2 + $0x550] sm:$0xff]
    %v200 = vld [vmem:[%s2 + $0x558] sm:$0xff]
    %v201 = vld [vmem:[%s2 + $0x560] sm:$0xff]
    %v202 = vld [vmem:[%s2 + $0x568] sm:$0xff]
    %v203 = vld [vmem:[%s2 + $0x570] sm:$0xff]
    %v204 = vld [vmem:[%s2 + $0x578] sm:$0xff]
    %v205 = vld [vmem:[%s2 + $0x580] sm:$0xff]
    %v206 = vld [vmem:[%s2 + $0x588] sm:$0xff]
    %v207 = vld [vmem:[%s2 + $0x590] sm:$0xff]
    %v208 = vld [vmem:[%s2 + $0x598] sm:$0xff]
    %v209 = vld [vmem:[%s2 + $0x5a0] sm:$0xff]
    %v210 = vld [vmem:[%s2 + $0x5a8] sm:$0xff]
    %v211 = vld [vmem:[%s2 + $0x5b0] sm:$0xff]
    %v212 = vld [vmem:[%s2 + $0x5b8] sm:$0xff]
    %v213 = vld [vmem:[%s2 + $0x5c0] sm:$0xff]
    %v214 = vld [vmem:[%s2 + $0x5c8] sm:$0xff]
    %v215 = vld [vmem:[%s2 + $0x5d0] sm:$0xff]
    %v216 = vld [vmem:[%s2 + $0x5d8] sm:$0xff]
    %v217 = vld [vmem:[%s2 + $0x5e0] sm:$0xff]
    %v218 = vld [vmem:[%s2 + $0x5e8] sm:$0xff]
    %v219 = vld [vmem:[%s2 + $0x5f0] sm:$0xff]
    %v220 = vld [vmem:[%s2 + $0x5f8] sm:$0xff]
    %v221 = vld [vmem:[%s2 + $0x600] sm:$0xff]
    %v222 = vld [vmem:[%s2 + $0x608] sm:$0xff]
    %v223 = vld [vmem:[%s2 + $0x610] sm:$0xff]
    %v224 = vld [vmem:[%s2 + $0x618] sm:$0xff]
    %v225 = vld [vmem:[%s2 + $0x620] sm:$0xff]
    %v226 = vld [vmem:[%s2 + $0x628] sm:$0xff]
    %v227 = vld [vmem:[%s2 + $0x630] sm:$0xff]
    %v228 = vld [vmem:[%s2 + $0x638] sm:$0xff]
    %v229 = vld [vmem:[%s2 + $0x640] sm:$0xff]
    %v230 = vld [vmem:[%s2 + $0x648] sm:$0xff]
    %v231 = vld [vmem:[%s2 + $0x650] sm:$0xff]
    %v232 = vld [vmem:[%s2 + $0x658] sm:$0xff]
    %v233 = vld [vmem:[%s2 + $0x660] sm:$0xff]
    %v234 = vld [vmem:[%s2 + $0x668] sm:$0xff]
    %v235 = vld [vmem:[%s2 + $0x670] sm:$0xff]
    %v236 = vld [vmem:[%s2 + $0x678] sm:$0xff]
    %v237 = vld [vmem:[%s2 + $0x680] sm:$0xff]
    %v238 = vld [vmem:[%s2 + $0x688] sm:$0xff]
    %v239 = vld [vmem:[%s2 + $0x690] sm:$0xff]
    %v240 = vld [vmem:[%s2 + $0x698] sm:$0xff]
    %v241 = vld [vmem:[%s2 + $0x6a0] sm:$0xff]
    %v242 = vld [vmem:[%s2 + $0x6a8] sm:$0xff]
    %v243 = vld [vmem:[%s2 + $0x6b0] sm:$0xff]
    %v244 = vld [vmem:[%s2 + $0x6b8] sm:$0xff]
    %v245 = vld [vmem:[%s2 + $0x6c0] sm:$0xff]
    %v246 = vld [vmem:[%s2 + $0x6c8] sm:$0xff]
    %v247 = vld [vmem:[%s2 + $0x6d0] sm:$0xff]
    %v248 = vld [vmem:[%s2 + $0x6d8] sm:$0xff]
    %v249 = vld [vmem:[%s2 + $0x6e0] sm:$0xff]
    %v250 = vld [vmem:[%s2 + $0x6e8] sm:$0xff]
    %v251 = vld [vmem:[%s2 + $0x6f0] sm:$0xff]
    %v252 = vld [vmem:[%s2 + $0x6f8] sm:$0xff]
    %v253 = vld [vmem:[%s2 + $0x700] sm:$0xff]
    %v254 = vld [vmem:[%s2 + $0x708] sm:$0xff]
    %v255 = vld [vmem:[%s2 + $0x710] sm:$0xff]
    %v256 = vld [vmem:[%s2 + $0x718] sm:$0xff]
    %v257 = vld [vmem:[%s2 + $0x720] sm:$0xff]
    %v258 = vld [vmem:[%s2 + $0x728] sm:$0xff]
    %v259 = vld [vmem:[%s2 + $0x730] sm:$0xff]
    %v260 = vld [vmem:[%s2 + $0x738] sm:$0xff]
    %v261 = vld [vmem:[%s2 + $0x740] sm:$0xff]
    %v262 = vld [vmem:[%s2 + $0x748] sm:$0xff]
    %v263 = vld [vmem:[%s2 + $0x750] sm:$0xff]
    %v264 = vld [vmem:[%s2 + $0x758] sm:$0xff]
    %v265 = vld [vmem:[%s2 + $0x760] sm:$0xff]
    %v266 = vld [vmem:[%s2 + $0x768] sm:$0xff]
    %v267 = vld [vmem:[%s2 + $0x770] sm:$0xff]
    %v268 = vld [vmem:[%s2 + $0x778] sm:$0xff]
    %v269 = vld [vmem:[%s2 + $0x780] sm:$0xff]
    %v270 = vld [vmem:[%s2 + $0x788] sm:$0xff]
    %v271 = vld [vmem:[%s2 + $0x790] sm:$0xff]
    %v272 = vld [vmem:[%s2 + $0x798] sm:$0xff]
    %v273 = vld [vmem:[%s2 + $0x7a0] sm:$0xff]
    %v274 = vld [vmem:[%s2 + $0x7a8] sm:$0xff]
    %v275 = vld [vmem:[%s2 + $0x7b0] sm:$0xff]
    %v276 = vld [vmem:[%s2 + $0x7b8] sm:$0xff]
    %v277 = vld [vmem:[%s2 + $0x7c0] sm:$0xff]
    %v278 = vld [vmem:[%s2 + $0x7c8] sm:$0xff]
    %v281 = vlaneseq
    %v282 = vshrl.u32 %v281, 7
    %v283 = vsub.s32 0, %v282
    %v284 = vrot.slane %v26, %v283
    %v285 = vlaneseq
    %v286 = vshrl.u32 %v285, 7
    %v287 = vsub.s32 1, %v286
    %v288 = vrot.slane %v26, %v287
    %v289 = vlaneseq
    %v290 = vshrl.u32 %v289, 7
    %v291 = vsub.s32 2, %v290
    %v292 = vrot.slane %v26, %v291
    %v293 = vlaneseq
    %v294 = vshrl.u32 %v293, 7
    %v295 = vsub.s32 3, %v294
    %v296 = vrot.slane %v26, %v295
    %v297 = vlaneseq
    %v298 = vshrl.u32 %v297, 7
    %v299 = vsub.s32 4, %v298
    %v300 = vrot.slane %v26, %v299
    %v301 = vlaneseq
    %v302 = vshrl.u32 %v301, 7
    %v303 = vsub.s32 5, %v302
    %v304 = vrot.slane %v26, %v303
    %v305 = vlaneseq
    %v306 = vshrl.u32 %v305, 7
    %v307 = vsub.s32 6, %v306
    %v308 = vrot.slane %v26, %v307
    %v309 = vlaneseq
    %v310 = vshrl.u32 %v309, 7
    %v311 = vsub.s32 7, %v310
    %v312 = vrot.slane %v26, %v311
    %v313 = vlaneseq
    %v314 = vshrl.u32 %v313, 7
    %v315 = vsub.s32 0, %v314
    %v316 = vrot.slane %v28, %v315
    %v317 = vlaneseq
    %v318 = vshrl.u32 %v317, 7
    %v319 = vsub.s32 1, %v318
    %v320 = vrot.slane %v28, %v319
    %v331 = vmul.f32 %v29, %v284
    %v332 = vmul.f32 %v30, %v288
    %v333 = vmul.f32 %v31, %v292
    %v334 = vmul.f32 %v32, %v296
    %v335 = vmul.f32 %v33, %v300
    %v336 = vmul.f32 %v34, %v304
    %v337 = vmul.f32 %v35, %v308
    %v338 = vmul.f32 %v36, %v312
    %v339 = vmul.f32 %v37, %v316
    %v340 = vmul.f32 %v38, %v320
    %v341 = vmul.f32 %v39, %v284
    %v342 = vmul.f32 %v40, %v288
    %v343 = vmul.f32 %v41, %v292
    %v344 = vmul.f32 %v42, %v296
    %v345 = vmul.f32 %v43, %v300
    %v346 = vmul.f32 %v44, %v304
    %v347 = vmul.f32 %v45, %v308
    %v348 = vmul.f32 %v46, %v312
    %v349 = vmul.f32 %v47, %v316
    %v350 = vmul.f32 %v48, %v320
    %v351 = vmul.f32 %v49, %v284
    %v352 = vmul.f32 %v50, %v288
    %v353 = vmul.f32 %v51, %v292
    %v354 = vmul.f32 %v52, %v296
    %v355 = vmul.f32 %v53, %v300
    %v356 = vmul.f32 %v54, %v304
    %v357 = vmul.f32 %v55, %v308
    %v358 = vmul.f32 %v56, %v312
    %v359 = vmul.f32 %v57, %v316
    %v360 = vmul.f32 %v58, %v320
    %v361 = vmul.f32 %v59, %v284
    %v362 = vmul.f32 %v60, %v288
    %v363 = vmul.f32 %v61, %v292
    %v364 = vmul.f32 %v62, %v296
    %v365 = vmul.f32 %v63, %v300
    %v366 = vmul.f32 %v64, %v304
    %v367 = vmul.f32 %v65, %v308
    %v368 = vmul.f32 %v66, %v312
    %v369 = vmul.f32 %v67, %v316
    %v370 = vmul.f32 %v68, %v320
    %v371 = vmul.f32 %v69, %v284
    %v372 = vmul.f32 %v70, %v288
    %v373 = vmul.f32 %v71, %v292
    %v374 = vmul.f32 %v72, %v296
    %v375 = vmul.f32 %v73, %v300
    %v376 = vmul.f32 %v74, %v304
    %v377 = vmul.f32 %v75, %v308
    %v378 = vmul.f32 %v76, %v312
    %v379 = vmul.f32 %v77, %v316
    %v380 = vmul.f32 %v78, %v320
    %v381 = vmul.f32 %v79, %v284
    %v382 = vmul.f32 %v80, %v288
    %v383 = vmul.f32 %v81, %v292
    %v384 = vmul.f32 %v82, %v296
    %v385 = vmul.f32 %v83, %v300
    %v386 = vmul.f32 %v84, %v304
    %v387 = vmul.f32 %v85, %v308
    %v388 = vmul.f32 %v86, %v312
    %v389 = vmul.f32 %v87, %v316
    %v390 = vmul.f32 %v88, %v320
    %v391 = vmul.f32 %v89, %v284
    %v392 = vmul.f32 %v90, %v288
    %v393 = vmul.f32 %v91, %v292
    %v394 = vmul.f32 %v92, %v296
    %v395 = vmul.f32 %v93, %v300
    %v396 = vmul.f32 %v94, %v304
    %v397 = vmul.f32 %v95, %v308
    %v398 = vmul.f32 %v96, %v312
    %v399 = vmul.f32 %v97, %v316
    %v400 = vmul.f32 %v98, %v320
    %v401 = vmul.f32 %v99, %v284
    %v402 = vmul.f32 %v100, %v288
    %v403 = vmul.f32 %v101, %v292
    %v404 = vmul.f32 %v102, %v296
    %v405 = vmul.f32 %v103, %v300
    %v406 = vmul.f32 %v104, %v304
    %v407 = vmul.f32 %v105, %v308
    %v408 = vmul.f32 %v106, %v312
    %v409 = vmul.f32 %v107, %v316
    %v410 = vmul.f32 %v108, %v320
    %v411 = vmul.f32 %v109, %v284
    %v412 = vmul.f32 %v110, %v288
    %v413 = vmul.f32 %v111, %v292
    %v414 = vmul.f32 %v112, %v296
    %v415 = vmul.f32 %v113, %v300
    %v416 = vmul.f32 %v114, %v304
    %v417 = vmul.f32 %v115, %v308
    %v418 = vmul.f32 %v116, %v312
    %v419 = vmul.f32 %v117, %v316
    %v420 = vmul.f32 %v118, %v320
    %v421 = vmul.f32 %v119, %v284
    %v422 = vmul.f32 %v120, %v288
    %v423 = vmul.f32 %v121, %v292
    %v424 = vmul.f32 %v122, %v296
    %v425 = vmul.f32 %v123, %v300
    %v426 = vmul.f32 %v124, %v304
    %v427 = vmul.f32 %v125, %v308
    %v428 = vmul.f32 %v126, %v312
    %v429 = vmul.f32 %v127, %v316
    %v430 = vmul.f32 %v128, %v320
    %v431 = vmul.f32 %v129, %v284
    %v432 = vmul.f32 %v130, %v288
    %v433 = vmul.f32 %v131, %v292
    %v434 = vmul.f32 %v132, %v296
    %v435 = vmul.f32 %v133, %v300
    %v436 = vmul.f32 %v134, %v304
    %v437 = vmul.f32 %v135, %v308
    %v438 = vmul.f32 %v136, %v312
    %v439 = vmul.f32 %v137, %v316
    %v440 = vmul.f32 %v138, %v320
    %v441 = vmul.f32 %v139, %v284
    %v442 = vmul.f32 %v140, %v288
    %v443 = vmul.f32 %v141, %v292
    %v444 = vmul.f32 %v142, %v296
    %v445 = vmul.f32 %v143, %v300
    %v446 = vmul.f32 %v144, %v304
    %v447 = vmul.f32 %v145, %v308
    %v448 = vmul.f32 %v146, %v312
    %v449 = vmul.f32 %v147, %v316
    %v450 = vmul.f32 %v148, %v320
    %v451 = vmul.f32 %v149, %v284
    %v452 = vmul.f32 %v150, %v288
    %v453 = vmul.f32 %v151, %v292
    %v454 = vmul.f32 %v152, %v296
    %v455 = vmul.f32 %v153, %v300
    %v456 = vmul.f32 %v154, %v304
    %v457 = vmul.f32 %v155, %v308
    %v458 = vmul.f32 %v156, %v312
    %v459 = vmul.f32 %v157, %v316
    %v460 = vmul.f32 %v158, %v320
    %v461 = vmul.f32 %v159, %v284
    %v462 = vmul.f32 %v160, %v288
    %v463 = vmul.f32 %v161, %v292
    %v464 = vmul.f32 %v162, %v296
    %v465 = vmul.f32 %v163, %v300
    %v466 = vmul.f32 %v164, %v304
    %v467 = vmul.f32 %v165, %v308
    %v468 = vmul.f32 %v166, %v312
    %v469 = vmul.f32 %v167, %v316
    %v470 = vmul.f32 %v168, %v320
    %v471 = vmul.f32 %v169, %v284
    %v472 = vmul.f32 %v170, %v288
    %v473 = vmul.f32 %v171, %v292
    %v474 = vmul.f32 %v172, %v296
    %v475 = vmul.f32 %v173, %v300
    %v476 = vmul.f32 %v174, %v304
    %v477 = vmul.f32 %v175, %v308
    %v478 = vmul.f32 %v176, %v312
    %v479 = vmul.f32 %v177, %v316
    %v480 = vmul.f32 %v178, %v320
    %v481 = vmul.f32 %v179, %v284
    %v482 = vmul.f32 %v180, %v288
    %v483 = vmul.f32 %v181, %v292
    %v484 = vmul.f32 %v182, %v296
    %v485 = vmul.f32 %v183, %v300
    %v486 = vmul.f32 %v184, %v304
    %v487 = vmul.f32 %v185, %v308
    %v488 = vmul.f32 %v186, %v312
    %v489 = vmul.f32 %v187, %v316
    %v490 = vmul.f32 %v188, %v320
    %v491 = vmul.f32 %v189, %v284
    %v492 = vmul.f32 %v190, %v288
    %v493 = vmul.f32 %v191, %v292
    %v494 = vmul.f32 %v192, %v296
    %v495 = vmul.f32 %v193, %v300
    %v496 = vmul.f32 %v194, %v304
    %v497 = vmul.f32 %v195, %v308
    %v498 = vmul.f32 %v196, %v312
    %v499 = vmul.f32 %v197, %v316
    %v500 = vmul.f32 %v198, %v320
    %v501 = vmul.f32 %v199, %v284
    %v502 = vmul.f32 %v200, %v288
    %v503 = vmul.f32 %v201, %v292
    %v504 = vmul.f32 %v202, %v296
    %v505 = vmul.f32 %v203, %v300
    %v506 = vmul.f32 %v204, %v304
    %v507 = vmul.f32 %v205, %v308
    %v508 = vmul.f32 %v206, %v312
    %v509 = vmul.f32 %v207, %v316
    %v510 = vmul.f32 %v208, %v320
    %v511 = vmul.f32 %v209, %v284
    %v512 = vmul.f32 %v210, %v288
    %v513 = vmul.f32 %v211, %v292
    %v514 = vmul.f32 %v212, %v296
    %v515 = vmul.f32 %v213, %v300
    %v516 = vmul.f32 %v214, %v304
    %v517 = vmul.f32 %v215, %v308
    %v518 = vmul.f32 %v216, %v312
    %v519 = vmul.f32 %v217, %v316
    %v520 = vmul.f32 %v218, %v320
    %v521 = vmul.f32 %v219, %v284
    %v522 = vmul.f32 %v220, %v288
    %v523 = vmul.f32 %v221, %v292
    %v524 = vmul.f32 %v222, %v296
    %v525 = vmul.f32 %v223, %v300
    %v526 = vmul.f32 %v224, %v304
    %v527 = vmul.f32 %v225, %v308
    %v528 = vmul.f32 %v226, %v312
    %v529 = vmul.f32 %v227, %v316
    %v530 = vmul.f32 %v228, %v320
    %v531 = vmul.f32 %v229, %v284
    %v532 = vmul.f32 %v230, %v288
    %v533 = vmul.f32 %v231, %v292
    %v534 = vmul.f32 %v232, %v296
    %v535 = vmul.f32 %v233, %v300
    %v536 = vmul.f32 %v234, %v304
    %v537 = vmul.f32 %v235, %v308
    %v538 = vmul.f32 %v236, %v312
    %v539 = vmul.f32 %v237, %v316
    %v540 = vmul.f32 %v238, %v320
    %v541 = vmul.f32 %v239, %v284
    %v542 = vmul.f32 %v240, %v288
    %v543 = vmul.f32 %v241, %v292
    %v544 = vmul.f32 %v242, %v296
    %v545 = vmul.f32 %v243, %v300
    %v546 = vmul.f32 %v244, %v304
    %v547 = vmul.f32 %v245, %v308
    %v548 = vmul.f32 %v246, %v312
    %v549 = vmul.f32 %v247, %v316
    %v550 = vmul.f32 %v248, %v320
    %v551 = vmul.f32 %v249, %v284
    %v552 = vmul.f32 %v250, %v288
    %v553 = vmul.f32 %v251, %v292
    %v554 = vmul.f32 %v252, %v296
    %v555 = vmul.f32 %v253, %v300
    %v556 = vmul.f32 %v254, %v304
    %v557 = vmul.f32 %v255, %v308
    %v558 = vmul.f32 %v256, %v312
    %v559 = vmul.f32 %v257, %v316
    %v560 = vmul.f32 %v258, %v320
    %v561 = vmul.f32 %v259, %v284
    %v562 = vmul.f32 %v260, %v288
    %v563 = vmul.f32 %v261, %v292
    %v564 = vmul.f32 %v262, %v296
    %v565 = vmul.f32 %v263, %v300
    %v566 = vmul.f32 %v264, %v304
    %v567 = vmul.f32 %v265, %v308
    %v568 = vmul.f32 %v266, %v312
    %v569 = vmul.f32 %v267, %v316
    %v570 = vmul.f32 %v268, %v320
    %v571 = vmul.f32 %v269, %v284
    %v572 = vmul.f32 %v270, %v288
    %v573 = vmul.f32 %v271, %v292
    %v574 = vmul.f32 %v272, %v296
    %v575 = vmul.f32 %v273, %v300
    %v576 = vmul.f32 %v274, %v304
    %v577 = vmul.f32 %v275, %v308
    %v578 = vmul.f32 %v276, %v312
    %v579 = vmul.f32 %v277, %v316
    %v580 = vmul.f32 %v278, %v320
    %v581 = vld [vmem:[%s0] sm:$0xff]
    %v582 = vld [vmem:[%s0 + $0x8] sm:$0xff]
    %v583 = vld [vmem:[%s0 + $0x10] sm:$0xff]
    %v584 = vld [vmem:[%s0 + $0x18] sm:$0xff]
    %v585 = vld [vmem:[%s0 + $0x20] sm:$0xff]
    %v586 = vld [vmem:[%s0 + $0x28] sm:$0xff]
    %v587 = vld [vmem:[%s0 + $0x30] sm:$0xff]
    %v588 = vld [vmem:[%s0 + $0x38] sm:$0xff]
    %v589 = vld [vmem:[%s0 + $0x40] sm:$0xff]
    %v590 = vld [vmem:[%s0 + $0x48] sm:$0xff]
    %v591 = vld [vmem:[%s0 + $0x50] sm:$0xff]
    %v592 = vld [vmem:[%s0 + $0x58] sm:$0xff]
    %v593 = vld [vmem:[%s0 + $0x60] sm:$0xff]
    %v594 = vld [vmem:[%s0 + $0x68] sm:$0xff]
    %v595 = vld [vmem:[%s0 + $0x70] sm:$0xff]
    %v596 = vld [vmem:[%s0 + $0x78] sm:$0xff]
    %v597 = vld [vmem:[%s0 + $0x80] sm:$0xff]
    %v598 = vld [vmem:[%s0 + $0x88] sm:$0xff]
    %v599 = vld [vmem:[%s0 + $0x90] sm:$0xff]
    %v600 = vld [vmem:[%s0 + $0x98] sm:$0xff]
    %v601 = vld [vmem:[%s0 + $0xa0] sm:$0xff]
    %v602 = vld [vmem:[%s0 + $0xa8] sm:$0xff]
    %v603 = vld [vmem:[%s0 + $0xb0] sm:$0xff]
    %v604 = vld [vmem:[%s0 + $0xb8] sm:$0xff]
    %v605 = vld [vmem:[%s0 + $0xc0] sm:$0xff]
    %v606 = vld [vmem:[%s0 + $0xc8] sm:$0xff]
    %v607 = vld [vmem:[%s0 + $0xd0] sm:$0xff]
    %v608 = vld [vmem:[%s0 + $0xd8] sm:$0xff]
    %v609 = vld [vmem:[%s0 + $0xe0] sm:$0xff]
    %v610 = vld [vmem:[%s0 + $0xe8] sm:$0xff]
    %v611 = vld [vmem:[%s0 + $0xf0] sm:$0xff]
    %v612 = vld [vmem:[%s0 + $0xf8] sm:$0xff]
    %v613 = vld [vmem:[%s0 + $0x100] sm:$0xff]
    %v614 = vld [vmem:[%s0 + $0x108] sm:$0xff]
    %v615 = vld [vmem:[%s0 + $0x110] sm:$0xff]
    %v616 = vld [vmem:[%s0 + $0x118] sm:$0xff]
    %v617 = vld [vmem:[%s0 + $0x120] sm:$0xff]
    %v618 = vld [vmem:[%s0 + $0x128] sm:$0xff]
    %v619 = vld [vmem:[%s0 + $0x130] sm:$0xff]
    %v620 = vld [vmem:[%s0 + $0x138] sm:$0xff]
    %v621 = vld [vmem:[%s0 + $0x140] sm:$0xff]
    %v622 = vld [vmem:[%s0 + $0x148] sm:$0xff]
    %v623 = vld [vmem:[%s0 + $0x150] sm:$0xff]
    %v624 = vld [vmem:[%s0 + $0x158] sm:$0xff]
    %v625 = vld [vmem:[%s0 + $0x160] sm:$0xff]
    %v626 = vld [vmem:[%s0 + $0x168] sm:$0xff]
    %v627 = vld [vmem:[%s0 + $0x170] sm:$0xff]
    %v628 = vld [vmem:[%s0 + $0x178] sm:$0xff]
    %v629 = vld [vmem:[%s0 + $0x180] sm:$0xff]
    %v630 = vld [vmem:[%s0 + $0x188] sm:$0xff]
    %v631 = vld [vmem:[%s0 + $0x190] sm:$0xff]
    %v632 = vld [vmem:[%s0 + $0x198] sm:$0xff]
    %v633 = vld [vmem:[%s0 + $0x1a0] sm:$0xff]
    %v634 = vld [vmem:[%s0 + $0x1a8] sm:$0xff]
    %v635 = vld [vmem:[%s0 + $0x1b0] sm:$0xff]
    %v636 = vld [vmem:[%s0 + $0x1b8] sm:$0xff]
    %v637 = vld [vmem:[%s0 + $0x1c0] sm:$0xff]
    %v638 = vld [vmem:[%s0 + $0x1c8] sm:$0xff]
    %v639 = vld [vmem:[%s0 + $0x1d0] sm:$0xff]
    %v640 = vld [vmem:[%s0 + $0x1d8] sm:$0xff]
    %v641 = vld [vmem:[%s0 + $0x1e0] sm:$0xff]
    %v642 = vld [vmem:[%s0 + $0x1e8] sm:$0xff]
    %v643 = vld [vmem:[%s0 + $0x1f0] sm:$0xff]
    %v644 = vld [vmem:[%s0 + $0x1f8] sm:$0xff]
    %v645 = vld [vmem:[%s0 + $0x200] sm:$0xff]
    %v646 = vld [vmem:[%s0 + $0x208] sm:$0xff]
    %v647 = vld [vmem:[%s0 + $0x210] sm:$0xff]
    %v648 = vld [vmem:[%s0 + $0x218] sm:$0xff]
    %v649 = vld [vmem:[%s0 + $0x220] sm:$0xff]
    %v650 = vld [vmem:[%s0 + $0x228] sm:$0xff]
    %v651 = vld [vmem:[%s0 + $0x230] sm:$0xff]
    %v652 = vld [vmem:[%s0 + $0x238] sm:$0xff]
    %v653 = vld [vmem:[%s0 + $0x240] sm:$0xff]
    %v654 = vld [vmem:[%s0 + $0x248] sm:$0xff]
    %v655 = vld [vmem:[%s0 + $0x250] sm:$0xff]
    %v656 = vld [vmem:[%s0 + $0x258] sm:$0xff]
    %v657 = vld [vmem:[%s0 + $0x260] sm:$0xff]
    %v658 = vld [vmem:[%s0 + $0x268] sm:$0xff]
    %v659 = vld [vmem:[%s0 + $0x270] sm:$0xff]
    %v660 = vld [vmem:[%s0 + $0x278] sm:$0xff]
    %v661 = vld [vmem:[%s0 + $0x280] sm:$0xff]
    %v662 = vld [vmem:[%s0 + $0x288] sm:$0xff]
    %v663 = vld [vmem:[%s0 + $0x290] sm:$0xff]
    %v664 = vld [vmem:[%s0 + $0x298] sm:$0xff]
    %v665 = vld [vmem:[%s0 + $0x2a0] sm:$0xff]
    %v666 = vld [vmem:[%s0 + $0x2a8] sm:$0xff]
    %v667 = vld [vmem:[%s0 + $0x2b0] sm:$0xff]
    %v668 = vld [vmem:[%s0 + $0x2b8] sm:$0xff]
    %v669 = vld [vmem:[%s0 + $0x2c0] sm:$0xff]
    %v670 = vld [vmem:[%s0 + $0x2c8] sm:$0xff]
    %v671 = vld [vmem:[%s0 + $0x2d0] sm:$0xff]
    %v672 = vld [vmem:[%s0 + $0x2d8] sm:$0xff]
    %v673 = vld [vmem:[%s0 + $0x2e0] sm:$0xff]
    %v674 = vld [vmem:[%s0 + $0x2e8] sm:$0xff]
    %v675 = vld [vmem:[%s0 + $0x2f0] sm:$0xff]
    %v676 = vld [vmem:[%s0 + $0x2f8] sm:$0xff]
    %v677 = vld [vmem:[%s0 + $0x300] sm:$0xff]
    %v678 = vld [vmem:[%s0 + $0x308] sm:$0xff]
    %v679 = vld [vmem:[%s0 + $0x310] sm:$0xff]
    %v680 = vld [vmem:[%s0 + $0x318] sm:$0xff]
    %v681 = vld [vmem:[%s0 + $0x320] sm:$0xff]
    %v682 = vld [vmem:[%s0 + $0x328] sm:$0xff]
    %v683 = vld [vmem:[%s0 + $0x330] sm:$0xff]
    %v684 = vld [vmem:[%s0 + $0x338] sm:$0xff]
    %v685 = vld [vmem:[%s0 + $0x340] sm:$0xff]
    %v686 = vld [vmem:[%s0 + $0x348] sm:$0xff]
    %v687 = vld [vmem:[%s0 + $0x350] sm:$0xff]
    %v688 = vld [vmem:[%s0 + $0x358] sm:$0xff]
    %v689 = vld [vmem:[%s0 + $0x360] sm:$0xff]
    %v690 = vld [vmem:[%s0 + $0x368] sm:$0xff]
    %v691 = vld [vmem:[%s0 + $0x370] sm:$0xff]
    %v692 = vld [vmem:[%s0 + $0x378] sm:$0xff]
    %v693 = vld [vmem:[%s0 + $0x380] sm:$0xff]
    %v694 = vld [vmem:[%s0 + $0x388] sm:$0xff]
    %v695 = vld [vmem:[%s0 + $0x390] sm:$0xff]
    %v696 = vld [vmem:[%s0 + $0x398] sm:$0xff]
    %v697 = vld [vmem:[%s0 + $0x3a0] sm:$0xff]
    %v698 = vld [vmem:[%s0 + $0x3a8] sm:$0xff]
    %v699 = vld [vmem:[%s0 + $0x3b0] sm:$0xff]
    %v700 = vld [vmem:[%s0 + $0x3b8] sm:$0xff]
    %v701 = vld [vmem:[%s0 + $0x3c0] sm:$0xff]
    %v702 = vld [vmem:[%s0 + $0x3c8] sm:$0xff]
    %v703 = vld [vmem:[%s0 + $0x3d0] sm:$0xff]
    %v704 = vld [vmem:[%s0 + $0x3d8] sm:$0xff]
    %v705 = vld [vmem:[%s0 + $0x3e0] sm:$0xff]
    %v706 = vld [vmem:[%s0 + $0x3e8] sm:$0xff]
    %v707 = vld [vmem:[%s0 + $0x3f0] sm:$0xff]
    %v708 = vld [vmem:[%s0 + $0x3f8] sm:$0xff]
    %v709 = vld [vmem:[%s0 + $0x400] sm:$0xff]
    %v710 = vld [vmem:[%s0 + $0x408] sm:$0xff]
    %v711 = vld [vmem:[%s0 + $0x410] sm:$0xff]
    %v712 = vld [vmem:[%s0 + $0x418] sm:$0xff]
    %v713 = vld [vmem:[%s0 + $0x420] sm:$0xff]
    %v714 = vld [vmem:[%s0 + $0x428] sm:$0xff]
    %v715 = vld [vmem:[%s0 + $0x430] sm:$0xff]
    %v716 = vld [vmem:[%s0 + $0x438] sm:$0xff]
    %v717 = vld [vmem:[%s0 + $0x440] sm:$0xff]
    %v718 = vld [vmem:[%s0 + $0x448] sm:$0xff]
    %v719 = vld [vmem:[%s0 + $0x450] sm:$0xff]
    %v720 = vld [vmem:[%s0 + $0x458] sm:$0xff]
    %v721 = vld [vmem:[%s0 + $0x460] sm:$0xff]
    %v722 = vld [vmem:[%s0 + $0x468] sm:$0xff]
    %v723 = vld [vmem:[%s0 + $0x470] sm:$0xff]
    %v724 = vld [vmem:[%s0 + $0x478] sm:$0xff]
    %v725 = vld [vmem:[%s0 + $0x480] sm:$0xff]
    %v726 = vld [vmem:[%s0 + $0x488] sm:$0xff]
    %v727 = vld [vmem:[%s0 + $0x490] sm:$0xff]
    %v728 = vld [vmem:[%s0 + $0x498] sm:$0xff]
    %v729 = vld [vmem:[%s0 + $0x4a0] sm:$0xff]
    %v730 = vld [vmem:[%s0 + $0x4a8] sm:$0xff]
    %v731 = vld [vmem:[%s0 + $0x4b0] sm:$0xff]
    %v732 = vld [vmem:[%s0 + $0x4b8] sm:$0xff]
    %v733 = vld [vmem:[%s0 + $0x4c0] sm:$0xff]
    %v734 = vld [vmem:[%s0 + $0x4c8] sm:$0xff]
    %v735 = vld [vmem:[%s0 + $0x4d0] sm:$0xff]
    %v736 = vld [vmem:[%s0 + $0x4d8] sm:$0xff]
    %v737 = vld [vmem:[%s0 + $0x4e0] sm:$0xff]
    %v738 = vld [vmem:[%s0 + $0x4e8] sm:$0xff]
    %v739 = vld [vmem:[%s0 + $0x4f0] sm:$0xff]
    %v740 = vld [vmem:[%s0 + $0x4f8] sm:$0xff]
    %v741 = vld [vmem:[%s0 + $0x500] sm:$0xff]
    %v742 = vld [vmem:[%s0 + $0x508] sm:$0xff]
    %v743 = vld [vmem:[%s0 + $0x510] sm:$0xff]
    %v744 = vld [vmem:[%s0 + $0x518] sm:$0xff]
    %v745 = vld [vmem:[%s0 + $0x520] sm:$0xff]
    %v746 = vld [vmem:[%s0 + $0x528] sm:$0xff]
    %v747 = vld [vmem:[%s0 + $0x530] sm:$0xff]
    %v748 = vld [vmem:[%s0 + $0x538] sm:$0xff]
    %v749 = vld [vmem:[%s0 + $0x540] sm:$0xff]
    %v750 = vld [vmem:[%s0 + $0x548] sm:$0xff]
    %v751 = vld [vmem:[%s0 + $0x550] sm:$0xff]
    %v752 = vld [vmem:[%s0 + $0x558] sm:$0xff]
    %v753 = vld [vmem:[%s0 + $0x560] sm:$0xff]
    %v754 = vld [vmem:[%s0 + $0x568] sm:$0xff]
    %v755 = vld [vmem:[%s0 + $0x570] sm:$0xff]
    %v756 = vld [vmem:[%s0 + $0x578] sm:$0xff]
    %v757 = vld [vmem:[%s0 + $0x580] sm:$0xff]
    %v758 = vld [vmem:[%s0 + $0x588] sm:$0xff]
    %v759 = vld [vmem:[%s0 + $0x590] sm:$0xff]
    %v760 = vld [vmem:[%s0 + $0x598] sm:$0xff]
    %v761 = vld [vmem:[%s0 + $0x5a0] sm:$0xff]
    %v762 = vld [vmem:[%s0 + $0x5a8] sm:$0xff]
    %v763 = vld [vmem:[%s0 + $0x5b0] sm:$0xff]
    %v764 = vld [vmem:[%s0 + $0x5b8] sm:$0xff]
    %v765 = vld [vmem:[%s0 + $0x5c0] sm:$0xff]
    %v766 = vld [vmem:[%s0 + $0x5c8] sm:$0xff]
    %v767 = vld [vmem:[%s0 + $0x5d0] sm:$0xff]
    %v768 = vld [vmem:[%s0 + $0x5d8] sm:$0xff]
    %v769 = vld [vmem:[%s0 + $0x5e0] sm:$0xff]
    %v770 = vld [vmem:[%s0 + $0x5e8] sm:$0xff]
    %v771 = vld [vmem:[%s0 + $0x5f0] sm:$0xff]
    %v772 = vld [vmem:[%s0 + $0x5f8] sm:$0xff]
    %v773 = vld [vmem:[%s0 + $0x600] sm:$0xff]
    %v774 = vld [vmem:[%s0 + $0x608] sm:$0xff]
    %v775 = vld [vmem:[%s0 + $0x610] sm:$0xff]
    %v776 = vld [vmem:[%s0 + $0x618] sm:$0xff]
    %v777 = vld [vmem:[%s0 + $0x620] sm:$0xff]
    %v778 = vld [vmem:[%s0 + $0x628] sm:$0xff]
    %v779 = vld [vmem:[%s0 + $0x630] sm:$0xff]
    %v780 = vld [vmem:[%s0 + $0x638] sm:$0xff]
    %v781 = vld [vmem:[%s0 + $0x640] sm:$0xff]
    %v782 = vld [vmem:[%s0 + $0x648] sm:$0xff]
    %v783 = vld [vmem:[%s0 + $0x650] sm:$0xff]
    %v784 = vld [vmem:[%s0 + $0x658] sm:$0xff]
    %v785 = vld [vmem:[%s0 + $0x660] sm:$0xff]
    %v786 = vld [vmem:[%s0 + $0x668] sm:$0xff]
    %v787 = vld [vmem:[%s0 + $0x670] sm:$0xff]
    %v788 = vld [vmem:[%s0 + $0x678] sm:$0xff]
    %v789 = vld [vmem:[%s0 + $0x680] sm:$0xff]
    %v790 = vld [vmem:[%s0 + $0x688] sm:$0xff]
    %v791 = vld [vmem:[%s0 + $0x690] sm:$0xff]
    %v792 = vld [vmem:[%s0 + $0x698] sm:$0xff]
    %v793 = vld [vmem:[%s0 + $0x6a0] sm:$0xff]
    %v794 = vld [vmem:[%s0 + $0x6a8] sm:$0xff]
    %v795 = vld [vmem:[%s0 + $0x6b0] sm:$0xff]
    %v796 = vld [vmem:[%s0 + $0x6b8] sm:$0xff]
    %v797 = vld [vmem:[%s0 + $0x6c0] sm:$0xff]
    %v798 = vld [vmem:[%s0 + $0x6c8] sm:$0xff]
    %v799 = vld [vmem:[%s0 + $0x6d0] sm:$0xff]
    %v800 = vld [vmem:[%s0 + $0x6d8] sm:$0xff]
    %v801 = vld [vmem:[%s0 + $0x6e0] sm:$0xff]
    %v802 = vld [vmem:[%s0 + $0x6e8] sm:$0xff]
    %v803 = vld [vmem:[%s0 + $0x6f0] sm:$0xff]
    %v804 = vld [vmem:[%s0 + $0x6f8] sm:$0xff]
    %v805 = vld [vmem:[%s0 + $0x700] sm:$0xff]
    %v806 = vld [vmem:[%s0 + $0x708] sm:$0xff]
    %v807 = vld [vmem:[%s0 + $0x710] sm:$0xff]
    %v808 = vld [vmem:[%s0 + $0x718] sm:$0xff]
    %v809 = vld [vmem:[%s0 + $0x720] sm:$0xff]
    %v810 = vld [vmem:[%s0 + $0x728] sm:$0xff]
    %v811 = vld [vmem:[%s0 + $0x730] sm:$0xff]
    %v812 = vld [vmem:[%s0 + $0x738] sm:$0xff]
    %v813 = vld [vmem:[%s0 + $0x740] sm:$0xff]
    %v814 = vld [vmem:[%s0 + $0x748] sm:$0xff]
    %v815 = vld [vmem:[%s0 + $0x750] sm:$0xff]
    %v816 = vld [vmem:[%s0 + $0x758] sm:$0xff]
    %v817 = vld [vmem:[%s0 + $0x760] sm:$0xff]
    %v818 = vld [vmem:[%s0 + $0x768] sm:$0xff]
    %v819 = vld [vmem:[%s0 + $0x770] sm:$0xff]
    %v820 = vld [vmem:[%s0 + $0x778] sm:$0xff]
    %v821 = vld [vmem:[%s0 + $0x780] sm:$0xff]
    %v822 = vld [vmem:[%s0 + $0x788] sm:$0xff]
    %v823 = vld [vmem:[%s0 + $0x790] sm:$0xff]
    %v824 = vld [vmem:[%s0 + $0x798] sm:$0xff]
    %v825 = vld [vmem:[%s0 + $0x7a0] sm:$0xff]
    %v826 = vld [vmem:[%s0 + $0x7a8] sm:$0xff]
    %v827 = vld [vmem:[%s0 + $0x7b0] sm:$0xff]
    %v828 = vld [vmem:[%s0 + $0x7b8] sm:$0xff]
    %v829 = vld [vmem:[%s0 + $0x7c0] sm:$0xff]
    %v830 = vld [vmem:[%s0 + $0x7c8] sm:$0xff]
    %v831 = vld [vmem:[%s0 + $0x7d0] sm:$0xff]
    %v832 = vld [vmem:[%s0 + $0x7d8] sm:$0xff]
    %v833 = vld [vmem:[%s0 + $0x7e0] sm:$0xff]
    %v834 = vld [vmem:[%s0 + $0x7e8] sm:$0xff]
    %v835 = vld [vmem:[%s0 + $0x7f0] sm:$0xff]
    %v836 = vld [vmem:[%s0 + $0x7f8] sm:$0xff]
    %v837 = vld [vmem:[%s0 + $0x800] sm:$0xff]
    %v838 = vld [vmem:[%s0 + $0x808] sm:$0xff]
    %v839 = vld [vmem:[%s0 + $0x810] sm:$0xff]
    %v840 = vld [vmem:[%s0 + $0x818] sm:$0xff]
    %v841 = vld [vmem:[%s0 + $0x820] sm:$0xff]
    %v842 = vld [vmem:[%s0 + $0x828] sm:$0xff]
    %v843 = vld [vmem:[%s0 + $0x830] sm:$0xff]
    %v844 = vld [vmem:[%s0 + $0x838] sm:$0xff]
    %v845 = vld [vmem:[%s0 + $0x840] sm:$0xff]
    %v846 = vld [vmem:[%s0 + $0x848] sm:$0xff]
    %v847 = vld [vmem:[%s0 + $0x850] sm:$0xff]
    %v848 = vld [vmem:[%s0 + $0x858] sm:$0xff]
    %v849 = vld [vmem:[%s0 + $0x860] sm:$0xff]
    %v850 = vld [vmem:[%s0 + $0x868] sm:$0xff]
    %v851 = vld [vmem:[%s0 + $0x870] sm:$0xff]
    %v852 = vld [vmem:[%s0 + $0x878] sm:$0xff]
    %v853 = vld [vmem:[%s0 + $0x880] sm:$0xff]
    %v854 = vld [vmem:[%s0 + $0x888] sm:$0xff]
    %v855 = vld [vmem:[%s0 + $0x890] sm:$0xff]
    %v856 = vld [vmem:[%s0 + $0x898] sm:$0xff]
    %v857 = vld [vmem:[%s0 + $0x8a0] sm:$0xff]
    %v858 = vld [vmem:[%s0 + $0x8a8] sm:$0xff]
    %v859 = vld [vmem:[%s0 + $0x8b0] sm:$0xff]
    %v860 = vld [vmem:[%s0 + $0x8b8] sm:$0xff]
    %v861 = vld [vmem:[%s0 + $0x8c0] sm:$0xff]
    %v862 = vld [vmem:[%s0 + $0x8c8] sm:$0xff]
    %v863 = vld [vmem:[%s0 + $0x8d0] sm:$0xff]
    %v864 = vld [vmem:[%s0 + $0x8d8] sm:$0xff]
    %v865 = vld [vmem:[%s0 + $0x8e0] sm:$0xff]
    %v866 = vld [vmem:[%s0 + $0x8e8] sm:$0xff]
    %v867 = vld [vmem:[%s0 + $0x8f0] sm:$0xff]
    %v868 = vld [vmem:[%s0 + $0x8f8] sm:$0xff]
    %v869 = vld [vmem:[%s0 + $0x900] sm:$0xff]
    %v870 = vld [vmem:[%s0 + $0x908] sm:$0xff]
    %v871 = vld [vmem:[%s0 + $0x910] sm:$0xff]
    %v872 = vld [vmem:[%s0 + $0x918] sm:$0xff]
    %v873 = vld [vmem:[%s0 + $0x920] sm:$0xff]
    %v874 = vld [vmem:[%s0 + $0x928] sm:$0xff]
    %v875 = vld [vmem:[%s0 + $0x930] sm:$0xff]
    %v876 = vld [vmem:[%s0 + $0x938] sm:$0xff]
    %v877 = vld [vmem:[%s0 + $0x940] sm:$0xff]
    %v878 = vld [vmem:[%s0 + $0x948] sm:$0xff]
    %v879 = vld [vmem:[%s0 + $0x950] sm:$0xff]
    %v880 = vld [vmem:[%s0 + $0x958] sm:$0xff]
    %vm881 = vcmask 392192
    %v883 = vsel %vm881, %v340, 0
    %v886 = vsel %vm881, %v350, 0
    %v889 = vsel %vm881, %v360, 0
    %v892 = vsel %vm881, %v370, 0
    %v895 = vsel %vm881, %v380, 0
    %v898 = vsel %vm881, %v390, 0
    %v901 = vsel %vm881, %v400, 0
    %v904 = vsel %vm881, %v410, 0
    %v907 = vsel %vm881, %v420, 0
    %v910 = vsel %vm881, %v430, 0
    %v913 = vsel %vm881, %v440, 0
    %v916 = vsel %vm881, %v450, 0
    %v919 = vsel %vm881, %v460, 0
    %v922 = vsel %vm881, %v470, 0
    %v925 = vsel %vm881, %v480, 0
    %v928 = vsel %vm881, %v490, 0
    %v931 = vsel %vm881, %v500, 0
    %v934 = vsel %vm881, %v510, 0
    %v937 = vsel %vm881, %v520, 0
    %v940 = vsel %vm881, %v530, 0
    %v943 = vsel %vm881, %v540, 0
    %v946 = vsel %vm881, %v550, 0
    %v949 = vsel %vm881, %v560, 0
    %v952 = vsel %vm881, %v570, 0
    %v955 = vsel %vm881, %v580, 0
    %957 = vmatprep.subr.mxu0 %v612
    %958 = vmatpush1.msra.mxu0 %v611
    %959 = vmatprep.subr.mxu0 %v610
    %960 = vmatpush1.msra.mxu0 %v609
    %961 = vmatprep.subr.mxu0 %v608
    %962 = vmatpush1.msra.mxu0 %v607
    %963 = vmatprep.subr.mxu0 %v606
    %964 = vmatpush1.msra.mxu0 %v605
    %965 = vmatprep.subr.mxu0 %v604
    %966 = vmatpush1.msra.mxu0 %v603
    %967 = vmatprep.subr.mxu0 %v602
    %968 = vmatpush1.msra.mxu0 %v601
    %969 = vmatprep.subr.mxu0 %v600
    %970 = vmatpush1.msra.mxu0 %v599
    %971 = vmatprep.subr.mxu0 %v598
    %972 = vmatpush1.msra.mxu0 %v597
    %973 = vmatprep.subr.mxu0 %v596
    %974 = vmatpush1.msra.mxu0 %v595
    %975 = vmatprep.subr.mxu0 %v594
    %976 = vmatpush1.msra.mxu0 %v593
    %977 = vmatprep.subr.mxu0 %v592
    %978 = vmatpush1.msra.mxu0 %v591
    %979 = vmatprep.subr.mxu0 %v590
    %980 = vmatpush1.msra.mxu0 %v589
    %981 = vmatprep.subr.mxu0 %v588
    %982 = vmatpush1.msra.mxu0 %v587
    %983 = vmatprep.subr.mxu0 %v586
    %984 = vmatpush1.msra.mxu0 %v585
    %985 = vmatprep.subr.mxu0 %v584
    %986 = vmatpush1.msra.mxu0 %v583
    %987 = vmatprep.subr.mxu0 %v582
    %988 = vmatpush1.msra.mxu0 %v581
    %989 = vmatprep.subr.mxu0 %v644
    %990 = vmatpush2.msra.mxu0 %v643
    %991 = vmatprep.subr.mxu0 %v642
    %992 = vmatpush2.msra.mxu0 %v641
    %993 = vmatprep.subr.mxu0 %v640
    %994 = vmatpush2.msra.mxu0 %v639
    %995 = vmatprep.subr.mxu0 %v638
    %996 = vmatpush2.msra.mxu0 %v637
    %997 = vmatprep.subr.mxu0 %v636
    %998 = vmatpush2.msra.mxu0 %v635
    %999 = vmatprep.subr.mxu0 %v634
    %1000 = vmatpush2.msra.mxu0 %v633
    %1001 = vmatprep.subr.mxu0 %v632
    %1002 = vmatpush2.msra.mxu0 %v631
    %1003 = vmatprep.subr.mxu0 %v630
    %1004 = vmatpush2.msra.mxu0 %v629
    %1005 = vmatprep.subr.mxu0 %v628
    %1006 = vmatpush2.msra.mxu0 %v627
    %1007 = vmatprep.subr.mxu0 %v626
    %1008 = vmatpush2.msra.mxu0 %v625
    %1009 = vmatprep.subr.mxu0 %v624
    %1010 = vmatpush2.msra.mxu0 %v623
    %1011 = vmatprep.subr.mxu0 %v622
    %1012 = vmatpush2.msra.mxu0 %v621
    %1013 = vmatprep.subr.mxu0 %v620
    %1014 = vmatpush2.msra.mxu0 %v619
    %1015 = vmatprep.subr.mxu0 %v618
    %1016 = vmatpush2.msra.mxu0 %v617
    %1017 = vmatprep.subr.mxu0 %v616
    %1018 = vmatpush2.msra.mxu0 %v615
    %1019 = vmatprep.subr.mxu0 %v614
    %1020 = vmatpush2.msra.mxu0 %v613
    %1021 = vmatprep.mubr.f32.mxu0 %v332
    %1022 = vmatmul.mubr.f32.gmra.mxu0 %v331
    %v1023 = vpop.f32.mrf.mxu0
    %v1024 = vadd.f32 0.0, %v1023
    %v1025 = vpop.f32.mrf.mxu0
    %v1026 = vadd.f32 0.0, %v1025
    %1027 = vmatprep.mubr.f32.mxu0 %v342
    %1028 = vmatmul.mubr.f32.gmra.mxu0 %v341
    %v1029 = vpop.f32.mrf.mxu0
    %v1030 = vadd.f32 0.0, %v1029
    %v1031 = vpop.f32.mrf.mxu0
    %v1032 = vadd.f32 0.0, %v1031
    %1033 = vmatprep.mubr.f32.mxu0 %v352
    %1034 = vmatmul.mubr.f32.gmra.mxu0 %v351
    %v1035 = vpop.f32.mrf.mxu0
    %v1036 = vadd.f32 0.0, %v1035
    %v1037 = vpop.f32.mrf.mxu0
    %v1038 = vadd.f32 0.0, %v1037
    %1039 = vmatprep.mubr.f32.mxu0 %v362
    %1040 = vmatmul.mubr.f32.gmra.mxu0 %v361
    %v1041 = vpop.f32.mrf.mxu0
    %v1042 = vadd.f32 0.0, %v1041
    %v1043 = vpop.f32.mrf.mxu0
    %v1044 = vadd.f32 0.0, %v1043
    %1045 = vmatprep.mubr.f32.mxu0 %v372
    %1046 = vmatmul.mubr.f32.gmra.mxu0 %v371
    %v1047 = vpop.f32.mrf.mxu0
    %v1048 = vadd.f32 0.0, %v1047
    %v1049 = vpop.f32.mrf.mxu0
    %v1050 = vadd.f32 0.0, %v1049
    %1051 = vmatprep.mubr.f32.mxu0 %v382
    %1052 = vmatmul.mubr.f32.gmra.mxu0 %v381
    %v1053 = vpop.f32.mrf.mxu0
    %v1054 = vadd.f32 0.0, %v1053
    %v1055 = vpop.f32.mrf.mxu0
    %v1056 = vadd.f32 0.0, %v1055
    %1057 = vmatprep.mubr.f32.mxu0 %v392
    %1058 = vmatmul.mubr.f32.gmra.mxu0 %v391
    %v1059 = vpop.f32.mrf.mxu0
    %v1060 = vadd.f32 0.0, %v1059
    %v1061 = vpop.f32.mrf.mxu0
    %v1062 = vadd.f32 0.0, %v1061
    %1063 = vmatprep.mubr.f32.mxu0 %v402
    %1064 = vmatmul.mubr.f32.gmra.mxu0 %v401
    %v1065 = vpop.f32.mrf.mxu0
    %v1066 = vadd.f32 0.0, %v1065
    %v1067 = vpop.f32.mrf.mxu0
    %v1068 = vadd.f32 0.0, %v1067
    %1069 = vmatprep.mubr.f32.mxu0 %v412
    %1070 = vmatmul.mubr.f32.gmra.mxu0 %v411
    %v1071 = vpop.f32.mrf.mxu0
    %v1072 = vadd.f32 0.0, %v1071
    %v1073 = vpop.f32.mrf.mxu0
    %v1074 = vadd.f32 0.0, %v1073
    %1075 = vmatprep.mubr.f32.mxu0 %v422
    %1076 = vmatmul.mubr.f32.gmra.mxu0 %v421
    %v1077 = vpop.f32.mrf.mxu0
    %v1078 = vadd.f32 0.0, %v1077
    %v1079 = vpop.f32.mrf.mxu0
    %v1080 = vadd.f32 0.0, %v1079
    %1081 = vmatprep.mubr.f32.mxu0 %v432
    %1082 = vmatmul.mubr.f32.gmra.mxu0 %v431
    %v1083 = vpop.f32.mrf.mxu0
    %v1084 = vadd.f32 0.0, %v1083
    %v1085 = vpop.f32.mrf.mxu0
    %v1086 = vadd.f32 0.0, %v1085
    %1087 = vmatprep.mubr.f32.mxu0 %v442
    %1088 = vmatmul.mubr.f32.gmra.mxu0 %v441
    %v1089 = vpop.f32.mrf.mxu0
    %v1090 = vadd.f32 0.0, %v1089
    %v1091 = vpop.f32.mrf.mxu0
    %v1092 = vadd.f32 0.0, %v1091
    %1093 = vmatprep.mubr.f32.mxu0 %v452
    %1094 = vmatmul.mubr.f32.gmra.mxu0 %v451
    %v1095 = vpop.f32.mrf.mxu0
    %v1096 = vadd.f32 0.0, %v1095
    %v1097 = vpop.f32.mrf.mxu0
    %v1098 = vadd.f32 0.0, %v1097
    %1099 = vmatprep.mubr.f32.mxu0 %v462
    %1100 = vmatmul.mubr.f32.gmra.mxu0 %v461
    %v1101 = vpop.f32.mrf.mxu0
    %v1102 = vadd.f32 0.0, %v1101
    %v1103 = vpop.f32.mrf.mxu0
    %v1104 = vadd.f32 0.0, %v1103
    %1105 = vmatprep.mubr.f32.mxu0 %v472
    %1106 = vmatmul.mubr.f32.gmra.mxu0 %v471
    %v1107 = vpop.f32.mrf.mxu0
    %v1108 = vadd.f32 0.0, %v1107
    %v1109 = vpop.f32.mrf.mxu0
    %v1110 = vadd.f32 0.0, %v1109
    %1111 = vmatprep.mubr.f32.mxu0 %v482
    %1112 = vmatmul.mubr.f32.gmra.mxu0 %v481
    %v1113 = vpop.f32.mrf.mxu0
    %v1114 = vadd.f32 0.0, %v1113
    %v1115 = vpop.f32.mrf.mxu0
    %v1116 = vadd.f32 0.0, %v1115
    %1117 = vmatprep.mubr.f32.mxu0 %v492
    %1118 = vmatmul.mubr.f32.gmra.mxu0 %v491
    %v1119 = vpop.f32.mrf.mxu0
    %v1120 = vadd.f32 0.0, %v1119
    %v1121 = vpop.f32.mrf.mxu0
    %v1122 = vadd.f32 0.0, %v1121
    %1123 = vmatprep.mubr.f32.mxu0 %v502
    %1124 = vmatmul.mubr.f32.gmra.mxu0 %v501
    %v1125 = vpop.f32.mrf.mxu0
    %v1126 = vadd.f32 0.0, %v1125
    %v1127 = vpop.f32.mrf.mxu0
    %v1128 = vadd.f32 0.0, %v1127
    %1129 = vmatprep.mubr.f32.mxu0 %v512
    %1130 = vmatmul.mubr.f32.gmra.mxu0 %v511
    %v1131 = vpop.f32.mrf.mxu0
    %v1132 = vadd.f32 0.0, %v1131
    %v1133 = vpop.f32.mrf.mxu0
    %v1134 = vadd.f32 0.0, %v1133
    %1135 = vmatprep.mubr.f32.mxu0 %v522
    %1136 = vmatmul.mubr.f32.gmra.mxu0 %v521
    %v1137 = vpop.f32.mrf.mxu0
    %v1138 = vadd.f32 0.0, %v1137
    %v1139 = vpop.f32.mrf.mxu0
    %v1140 = vadd.f32 0.0, %v1139
    %1141 = vmatprep.mubr.f32.mxu0 %v532
    %1142 = vmatmul.mubr.f32.gmra.mxu0 %v531
    %v1143 = vpop.f32.mrf.mxu0
    %v1144 = vadd.f32 0.0, %v1143
    %v1145 = vpop.f32.mrf.mxu0
    %v1146 = vadd.f32 0.0, %v1145
    %1147 = vmatprep.mubr.f32.mxu0 %v542
    %1148 = vmatmul.mubr.f32.gmra.mxu0 %v541
    %v1149 = vpop.f32.mrf.mxu0
    %v1150 = vadd.f32 0.0, %v1149
    %v1151 = vpop.f32.mrf.mxu0
    %v1152 = vadd.f32 0.0, %v1151
    %1153 = vmatprep.mubr.f32.mxu0 %v552
    %1154 = vmatmul.mubr.f32.gmra.mxu0 %v551
    %v1155 = vpop.f32.mrf.mxu0
    %v1156 = vadd.f32 0.0, %v1155
    %v1157 = vpop.f32.mrf.mxu0
    %v1158 = vadd.f32 0.0, %v1157
    %1159 = vmatprep.mubr.f32.mxu0 %v562
    %1160 = vmatmul.mubr.f32.gmra.mxu0 %v561
    %v1161 = vpop.f32.mrf.mxu0
    %v1162 = vadd.f32 0.0, %v1161
    %v1163 = vpop.f32.mrf.mxu0
    %v1164 = vadd.f32 0.0, %v1163
    %1165 = vmatprep.mubr.f32.mxu0 %v572
    %1166 = vmatmul.mubr.f32.gmra.mxu0 %v571
    %v1167 = vpop.f32.mrf.mxu0
    %v1168 = vadd.f32 0.0, %v1167
    %v1169 = vpop.f32.mrf.mxu0
    %v1170 = vadd.f32 0.0, %v1169
    %1171 = vdwg.mxu0
    %1172 = vmatprep.subr.mxu0 %v676
    %1173 = vmatpush1.msra.mxu0 %v675
    %1174 = vmatprep.subr.mxu0 %v674
    %1175 = vmatpush1.msra.mxu0 %v673
    %1176 = vmatprep.subr.mxu0 %v672
    %1177 = vmatpush1.msra.mxu0 %v671
    %1178 = vmatprep.subr.mxu0 %v670
    %1179 = vmatpush1.msra.mxu0 %v669
    %1180 = vmatprep.subr.mxu0 %v668
    %1181 = vmatpush1.msra.mxu0 %v667
    %1182 = vmatprep.subr.mxu0 %v666
    %1183 = vmatpush1.msra.mxu0 %v665
    %1184 = vmatprep.subr.mxu0 %v664
    %1185 = vmatpush1.msra.mxu0 %v663
    %1186 = vmatprep.subr.mxu0 %v662
    %1187 = vmatpush1.msra.mxu0 %v661
    %1188 = vmatprep.subr.mxu0 %v660
    %1189 = vmatpush1.msra.mxu0 %v659
    %1190 = vmatprep.subr.mxu0 %v658
    %1191 = vmatpush1.msra.mxu0 %v657
    %1192 = vmatprep.subr.mxu0 %v656
    %1193 = vmatpush1.msra.mxu0 %v655
    %1194 = vmatprep.subr.mxu0 %v654
    %1195 = vmatpush1.msra.mxu0 %v653
    %1196 = vmatprep.subr.mxu0 %v652
    %1197 = vmatpush1.msra.mxu0 %v651
    %1198 = vmatprep.subr.mxu0 %v650
    %1199 = vmatpush1.msra.mxu0 %v649
    %1200 = vmatprep.subr.mxu0 %v648
    %1201 = vmatpush1.msra.mxu0 %v647
    %1202 = vmatprep.subr.mxu0 %v646
    %1203 = vmatpush1.msra.mxu0 %v645
    %1204 = vmatprep.subr.mxu0 %v708
    %1205 = vmatpush2.msra.mxu0 %v707
    %1206 = vmatprep.subr.mxu0 %v706
    %1207 = vmatpush2.msra.mxu0 %v705
    %1208 = vmatprep.subr.mxu0 %v704
    %1209 = vmatpush2.msra.mxu0 %v703
    %1210 = vmatprep.subr.mxu0 %v702
    %1211 = vmatpush2.msra.mxu0 %v701
    %1212 = vmatprep.subr.mxu0 %v700
    %1213 = vmatpush2.msra.mxu0 %v699
    %1214 = vmatprep.subr.mxu0 %v698
    %1215 = vmatpush2.msra.mxu0 %v697
    %1216 = vmatprep.subr.mxu0 %v696
    %1217 = vmatpush2.msra.mxu0 %v695
    %1218 = vmatprep.subr.mxu0 %v694
    %1219 = vmatpush2.msra.mxu0 %v693
    %1220 = vmatprep.subr.mxu0 %v692
    %1221 = vmatpush2.msra.mxu0 %v691
    %1222 = vmatprep.subr.mxu0 %v690
    %1223 = vmatpush2.msra.mxu0 %v689
    %1224 = vmatprep.subr.mxu0 %v688
    %1225 = vmatpush2.msra.mxu0 %v687
    %1226 = vmatprep.subr.mxu0 %v686
    %1227 = vmatpush2.msra.mxu0 %v685
    %1228 = vmatprep.subr.mxu0 %v684
    %1229 = vmatpush2.msra.mxu0 %v683
    %1230 = vmatprep.subr.mxu0 %v682
    %1231 = vmatpush2.msra.mxu0 %v681
    %1232 = vmatprep.subr.mxu0 %v680
    %1233 = vmatpush2.msra.mxu0 %v679
    %1234 = vmatprep.subr.mxu0 %v678
    %1235 = vmatpush2.msra.mxu0 %v677
    %1236 = vmatprep.mubr.f32.mxu0 %v334
    %1237 = vmatmul.mubr.f32.gmra.mxu0 %v333
    %v1238 = vpop.f32.mrf.mxu0
    %v1239 = vadd.f32 %v1024, %v1238
    %v1240 = vpop.f32.mrf.mxu0
    %v1241 = vadd.f32 %v1026, %v1240
    %1242 = vmatprep.mubr.f32.mxu0 %v344
    %1243 = vmatmul.mubr.f32.gmra.mxu0 %v343
    %v1244 = vpop.f32.mrf.mxu0
    %v1245 = vadd.f32 %v1030, %v1244
    %v1246 = vpop.f32.mrf.mxu0
    %v1247 = vadd.f32 %v1032, %v1246
    %1248 = vmatprep.mubr.f32.mxu0 %v354
    %1249 = vmatmul.mubr.f32.gmra.mxu0 %v353
    %v1250 = vpop.f32.mrf.mxu0
    %v1251 = vadd.f32 %v1036, %v1250
    %v1252 = vpop.f32.mrf.mxu0
    %v1253 = vadd.f32 %v1038, %v1252
    %1254 = vmatprep.mubr.f32.mxu0 %v364
    %1255 = vmatmul.mubr.f32.gmra.mxu0 %v363
    %v1256 = vpop.f32.mrf.mxu0
    %v1257 = vadd.f32 %v1042, %v1256
    %v1258 = vpop.f32.mrf.mxu0
    %v1259 = vadd.f32 %v1044, %v1258
    %1260 = vmatprep.mubr.f32.mxu0 %v374
    %1261 = vmatmul.mubr.f32.gmra.mxu0 %v373
    %v1262 = vpop.f32.mrf.mxu0
    %v1263 = vadd.f32 %v1048, %v1262
    %v1264 = vpop.f32.mrf.mxu0
    %v1265 = vadd.f32 %v1050, %v1264
    %1266 = vmatprep.mubr.f32.mxu0 %v384
    %1267 = vmatmul.mubr.f32.gmra.mxu0 %v383
    %v1268 = vpop.f32.mrf.mxu0
    %v1269 = vadd.f32 %v1054, %v1268
    %v1270 = vpop.f32.mrf.mxu0
    %v1271 = vadd.f32 %v1056, %v1270
    %1272 = vmatprep.mubr.f32.mxu0 %v394
    %1273 = vmatmul.mubr.f32.gmra.mxu0 %v393
    %v1274 = vpop.f32.mrf.mxu0
    %v1275 = vadd.f32 %v1060, %v1274
    %v1276 = vpop.f32.mrf.mxu0
    %v1277 = vadd.f32 %v1062, %v1276
    %1278 = vmatprep.mubr.f32.mxu0 %v404
    %1279 = vmatmul.mubr.f32.gmra.mxu0 %v403
    %v1280 = vpop.f32.mrf.mxu0
    %v1281 = vadd.f32 %v1066, %v1280
    %v1282 = vpop.f32.mrf.mxu0
    %v1283 = vadd.f32 %v1068, %v1282
    %1284 = vmatprep.mubr.f32.mxu0 %v414
    %1285 = vmatmul.mubr.f32.gmra.mxu0 %v413
    %v1286 = vpop.f32.mrf.mxu0
    %v1287 = vadd.f32 %v1072, %v1286
    %v1288 = vpop.f32.mrf.mxu0
    %v1289 = vadd.f32 %v1074, %v1288
    %1290 = vmatprep.mubr.f32.mxu0 %v424
    %1291 = vmatmul.mubr.f32.gmra.mxu0 %v423
    %v1292 = vpop.f32.mrf.mxu0
    %v1293 = vadd.f32 %v1078, %v1292
    %v1294 = vpop.f32.mrf.mxu0
    %v1295 = vadd.f32 %v1080, %v1294
    %1296 = vmatprep.mubr.f32.mxu0 %v434
    %1297 = vmatmul.mubr.f32.gmra.mxu0 %v433
    %v1298 = vpop.f32.mrf.mxu0
    %v1299 = vadd.f32 %v1084, %v1298
    %v1300 = vpop.f32.mrf.mxu0
    %v1301 = vadd.f32 %v1086, %v1300
    %1302 = vmatprep.mubr.f32.mxu0 %v444
    %1303 = vmatmul.mubr.f32.gmra.mxu0 %v443
    %v1304 = vpop.f32.mrf.mxu0
    %v1305 = vadd.f32 %v1090, %v1304
    %v1306 = vpop.f32.mrf.mxu0
    %v1307 = vadd.f32 %v1092, %v1306
    %1308 = vmatprep.mubr.f32.mxu0 %v454
    %1309 = vmatmul.mubr.f32.gmra.mxu0 %v453
    %v1310 = vpop.f32.mrf.mxu0
    %v1311 = vadd.f32 %v1096, %v1310
    %v1312 = vpop.f32.mrf.mxu0
    %v1313 = vadd.f32 %v1098, %v1312
    %1314 = vmatprep.mubr.f32.mxu0 %v464
    %1315 = vmatmul.mubr.f32.gmra.mxu0 %v463
    %v1316 = vpop.f32.mrf.mxu0
    %v1317 = vadd.f32 %v1102, %v1316
    %v1318 = vpop.f32.mrf.mxu0
    %v1319 = vadd.f32 %v1104, %v1318
    %1320 = vmatprep.mubr.f32.mxu0 %v474
    %1321 = vmatmul.mubr.f32.gmra.mxu0 %v473
    %v1322 = vpop.f32.mrf.mxu0
    %v1323 = vadd.f32 %v1108, %v1322
    %v1324 = vpop.f32.mrf.mxu0
    %v1325 = vadd.f32 %v1110, %v1324
    %1326 = vmatprep.mubr.f32.mxu0 %v484
    %1327 = vmatmul.mubr.f32.gmra.mxu0 %v483
    %v1328 = vpop.f32.mrf.mxu0
    %v1329 = vadd.f32 %v1114, %v1328
    %v1330 = vpop.f32.mrf.mxu0
    %v1331 = vadd.f32 %v1116, %v1330
    %1332 = vmatprep.mubr.f32.mxu0 %v494
    %1333 = vmatmul.mubr.f32.gmra.mxu0 %v493
    %v1334 = vpop.f32.mrf.mxu0
    %v1335 = vadd.f32 %v1120, %v1334
    %v1336 = vpop.f32.mrf.mxu0
    %v1337 = vadd.f32 %v1122, %v1336
    %1338 = vmatprep.mubr.f32.mxu0 %v504
    %1339 = vmatmul.mubr.f32.gmra.mxu0 %v503
    %v1340 = vpop.f32.mrf.mxu0
    %v1341 = vadd.f32 %v1126, %v1340
    %v1342 = vpop.f32.mrf.mxu0
    %v1343 = vadd.f32 %v1128, %v1342
    %1344 = vmatprep.mubr.f32.mxu0 %v514
    %1345 = vmatmul.mubr.f32.gmra.mxu0 %v513
    %v1346 = vpop.f32.mrf.mxu0
    %v1347 = vadd.f32 %v1132, %v1346
    %v1348 = vpop.f32.mrf.mxu0
    %v1349 = vadd.f32 %v1134, %v1348
    %1350 = vmatprep.mubr.f32.mxu0 %v524
    %1351 = vmatmul.mubr.f32.gmra.mxu0 %v523
    %v1352 = vpop.f32.mrf.mxu0
    %v1353 = vadd.f32 %v1138, %v1352
    %v1354 = vpop.f32.mrf.mxu0
    %v1355 = vadd.f32 %v1140, %v1354
    %1356 = vmatprep.mubr.f32.mxu0 %v534
    %1357 = vmatmul.mubr.f32.gmra.mxu0 %v533
    %v1358 = vpop.f32.mrf.mxu0
    %v1359 = vadd.f32 %v1144, %v1358
    %v1360 = vpop.f32.mrf.mxu0
    %v1361 = vadd.f32 %v1146, %v1360
    %1362 = vmatprep.mubr.f32.mxu0 %v544
    %1363 = vmatmul.mubr.f32.gmra.mxu0 %v543
    %v1364 = vpop.f32.mrf.mxu0
    %v1365 = vadd.f32 %v1150, %v1364
    %v1366 = vpop.f32.mrf.mxu0
    %v1367 = vadd.f32 %v1152, %v1366
    %1368 = vmatprep.mubr.f32.mxu0 %v554
    %1369 = vmatmul.mubr.f32.gmra.mxu0 %v553
    %v1370 = vpop.f32.mrf.mxu0
    %v1371 = vadd.f32 %v1156, %v1370
    %v1372 = vpop.f32.mrf.mxu0
    %v1373 = vadd.f32 %v1158, %v1372
    %1374 = vmatprep.mubr.f32.mxu0 %v564
    %1375 = vmatmul.mubr.f32.gmra.mxu0 %v563
    %v1376 = vpop.f32.mrf.mxu0
    %v1377 = vadd.f32 %v1162, %v1376
    %v1378 = vpop.f32.mrf.mxu0
    %v1379 = vadd.f32 %v1164, %v1378
    %1380 = vmatprep.mubr.f32.mxu0 %v574
    %1381 = vmatmul.mubr.f32.gmra.mxu0 %v573
    %v1382 = vpop.f32.mrf.mxu0
    %v1383 = vadd.f32 %v1168, %v1382
    %v1384 = vpop.f32.mrf.mxu0
    %v1385 = vadd.f32 %v1170, %v1384
    %1386 = vdwg.mxu0
    %1387 = vmatprep.subr.mxu0 %v740
    %1388 = vmatpush1.msra.mxu0 %v739
    %1389 = vmatprep.subr.mxu0 %v738
    %1390 = vmatpush1.msra.mxu0 %v737
    %1391 = vmatprep.subr.mxu0 %v736
    %1392 = vmatpush1.msra.mxu0 %v735
    %1393 = vmatprep.subr.mxu0 %v734
    %1394 = vmatpush1.msra.mxu0 %v733
    %1395 = vmatprep.subr.mxu0 %v732
    %1396 = vmatpush1.msra.mxu0 %v731
    %1397 = vmatprep.subr.mxu0 %v730
    %1398 = vmatpush1.msra.mxu0 %v729
    %1399 = vmatprep.subr.mxu0 %v728
    %1400 = vmatpush1.msra.mxu0 %v727
    %1401 = vmatprep.subr.mxu0 %v726
    %1402 = vmatpush1.msra.mxu0 %v725
    %1403 = vmatprep.subr.mxu0 %v724
    %1404 = vmatpush1.msra.mxu0 %v723
    %1405 = vmatprep.subr.mxu0 %v722
    %1406 = vmatpush1.msra.mxu0 %v721
    %1407 = vmatprep.subr.mxu0 %v720
    %1408 = vmatpush1.msra.mxu0 %v719
    %1409 = vmatprep.subr.mxu0 %v718
    %1410 = vmatpush1.msra.mxu0 %v717
    %1411 = vmatprep.subr.mxu0 %v716
    %1412 = vmatpush1.msra.mxu0 %v715
    %1413 = vmatprep.subr.mxu0 %v714
    %1414 = vmatpush1.msra.mxu0 %v713
    %1415 = vmatprep.subr.mxu0 %v712
    %1416 = vmatpush1.msra.mxu0 %v711
    %1417 = vmatprep.subr.mxu0 %v710
    %1418 = vmatpush1.msra.mxu0 %v709
    %1419 = vmatprep.subr.mxu0 %v772
    %1420 = vmatpush2.msra.mxu0 %v771
    %1421 = vmatprep.subr.mxu0 %v770
    %1422 = vmatpush2.msra.mxu0 %v769
    %1423 = vmatprep.subr.mxu0 %v768
    %1424 = vmatpush2.msra.mxu0 %v767
    %1425 = vmatprep.subr.mxu0 %v766
    %1426 = vmatpush2.msra.mxu0 %v765
    %1427 = vmatprep.subr.mxu0 %v764
    %1428 = vmatpush2.msra.mxu0 %v763
    %1429 = vmatprep.subr.mxu0 %v762
    %1430 = vmatpush2.msra.mxu0 %v761
    %1431 = vmatprep.subr.mxu0 %v760
    %1432 = vmatpush2.msra.mxu0 %v759
    %1433 = vmatprep.subr.mxu0 %v758
    %1434 = vmatpush2.msra.mxu0 %v757
    %1435 = vmatprep.subr.mxu0 %v756
    %1436 = vmatpush2.msra.mxu0 %v755
    %1437 = vmatprep.subr.mxu0 %v754
    %1438 = vmatpush2.msra.mxu0 %v753
    %1439 = vmatprep.subr.mxu0 %v752
    %1440 = vmatpush2.msra.mxu0 %v751
    %1441 = vmatprep.subr.mxu0 %v750
    %1442 = vmatpush2.msra.mxu0 %v749
    %1443 = vmatprep.subr.mxu0 %v748
    %1444 = vmatpush2.msra.mxu0 %v747
    %1445 = vmatprep.subr.mxu0 %v746
    %1446 = vmatpush2.msra.mxu0 %v745
    %1447 = vmatprep.subr.mxu0 %v744
    %1448 = vmatpush2.msra.mxu0 %v743
    %1449 = vmatprep.subr.mxu0 %v742
    %1450 = vmatpush2.msra.mxu0 %v741
    %1451 = vmatprep.mubr.f32.mxu0 %v336
    %1452 = vmatmul.mubr.f32.gmra.mxu0 %v335
    %v1453 = vpop.f32.mrf.mxu0
    %v1454 = vadd.f32 %v1239, %v1453
    %v1455 = vpop.f32.mrf.mxu0
    %v1456 = vadd.f32 %v1241, %v1455
    %1457 = vmatprep.mubr.f32.mxu0 %v346
    %1458 = vmatmul.mubr.f32.gmra.mxu0 %v345
    %v1459 = vpop.f32.mrf.mxu0
    %v1460 = vadd.f32 %v1245, %v1459
    %v1461 = vpop.f32.mrf.mxu0
    %v1462 = vadd.f32 %v1247, %v1461
    %1463 = vmatprep.mubr.f32.mxu0 %v356
    %1464 = vmatmul.mubr.f32.gmra.mxu0 %v355
    %v1465 = vpop.f32.mrf.mxu0
    %v1466 = vadd.f32 %v1251, %v1465
    %v1467 = vpop.f32.mrf.mxu0
    %v1468 = vadd.f32 %v1253, %v1467
    %1469 = vmatprep.mubr.f32.mxu0 %v366
    %1470 = vmatmul.mubr.f32.gmra.mxu0 %v365
    %v1471 = vpop.f32.mrf.mxu0
    %v1472 = vadd.f32 %v1257, %v1471
    %v1473 = vpop.f32.mrf.mxu0
    %v1474 = vadd.f32 %v1259, %v1473
    %1475 = vmatprep.mubr.f32.mxu0 %v376
    %1476 = vmatmul.mubr.f32.gmra.mxu0 %v375
    %v1477 = vpop.f32.mrf.mxu0
    %v1478 = vadd.f32 %v1263, %v1477
    %v1479 = vpop.f32.mrf.mxu0
    %v1480 = vadd.f32 %v1265, %v1479
    %1481 = vmatprep.mubr.f32.mxu0 %v386
    %1482 = vmatmul.mubr.f32.gmra.mxu0 %v385
    %v1483 = vpop.f32.mrf.mxu0
    %v1484 = vadd.f32 %v1269, %v1483
    %v1485 = vpop.f32.mrf.mxu0
    %v1486 = vadd.f32 %v1271, %v1485
    %1487 = vmatprep.mubr.f32.mxu0 %v396
    %1488 = vmatmul.mubr.f32.gmra.mxu0 %v395
    %v1489 = vpop.f32.mrf.mxu0
    %v1490 = vadd.f32 %v1275, %v1489
    %v1491 = vpop.f32.mrf.mxu0
    %v1492 = vadd.f32 %v1277, %v1491
    %1493 = vmatprep.mubr.f32.mxu0 %v406
    %1494 = vmatmul.mubr.f32.gmra.mxu0 %v405
    %v1495 = vpop.f32.mrf.mxu0
    %v1496 = vadd.f32 %v1281, %v1495
    %v1497 = vpop.f32.mrf.mxu0
    %v1498 = vadd.f32 %v1283, %v1497
    %1499 = vmatprep.mubr.f32.mxu0 %v416
    %1500 = vmatmul.mubr.f32.gmra.mxu0 %v415
    %v1501 = vpop.f32.mrf.mxu0
    %v1502 = vadd.f32 %v1287, %v1501
    %v1503 = vpop.f32.mrf.mxu0
    %v1504 = vadd.f32 %v1289, %v1503
    %1505 = vmatprep.mubr.f32.mxu0 %v426
    %1506 = vmatmul.mubr.f32.gmra.mxu0 %v425
    %v1507 = vpop.f32.mrf.mxu0
    %v1508 = vadd.f32 %v1293, %v1507
    %v1509 = vpop.f32.mrf.mxu0
    %v1510 = vadd.f32 %v1295, %v1509
    %1511 = vmatprep.mubr.f32.mxu0 %v436
    %1512 = vmatmul.mubr.f32.gmra.mxu0 %v435
    %v1513 = vpop.f32.mrf.mxu0
    %v1514 = vadd.f32 %v1299, %v1513
    %v1515 = vpop.f32.mrf.mxu0
    %v1516 = vadd.f32 %v1301, %v1515
    %1517 = vmatprep.mubr.f32.mxu0 %v446
    %1518 = vmatmul.mubr.f32.gmra.mxu0 %v445
    %v1519 = vpop.f32.mrf.mxu0
    %v1520 = vadd.f32 %v1305, %v1519
    %v1521 = vpop.f32.mrf.mxu0
    %v1522 = vadd.f32 %v1307, %v1521
    %1523 = vmatprep.mubr.f32.mxu0 %v456
    %1524 = vmatmul.mubr.f32.gmra.mxu0 %v455
    %v1525 = vpop.f32.mrf.mxu0
    %v1526 = vadd.f32 %v1311, %v1525
    %v1527 = vpop.f32.mrf.mxu0
    %v1528 = vadd.f32 %v1313, %v1527
    %1529 = vmatprep.mubr.f32.mxu0 %v466
    %1530 = vmatmul.mubr.f32.gmra.mxu0 %v465
    %v1531 = vpop.f32.mrf.mxu0
    %v1532 = vadd.f32 %v1317, %v1531
    %v1533 = vpop.f32.mrf.mxu0
    %v1534 = vadd.f32 %v1319, %v1533
    %1535 = vmatprep.mubr.f32.mxu0 %v476
    %1536 = vmatmul.mubr.f32.gmra.mxu0 %v475
    %v1537 = vpop.f32.mrf.mxu0
    %v1538 = vadd.f32 %v1323, %v1537
    %v1539 = vpop.f32.mrf.mxu0
    %v1540 = vadd.f32 %v1325, %v1539
    %1541 = vmatprep.mubr.f32.mxu0 %v486
    %1542 = vmatmul.mubr.f32.gmra.mxu0 %v485
    %v1543 = vpop.f32.mrf.mxu0
    %v1544 = vadd.f32 %v1329, %v1543
    %v1545 = vpop.f32.mrf.mxu0
    %v1546 = vadd.f32 %v1331, %v1545
    %1547 = vmatprep.mubr.f32.mxu0 %v496
    %1548 = vmatmul.mubr.f32.gmra.mxu0 %v495
    %v1549 = vpop.f32.mrf.mxu0
    %v1550 = vadd.f32 %v1335, %v1549
    %v1551 = vpop.f32.mrf.mxu0
    %v1552 = vadd.f32 %v1337, %v1551
    %1553 = vmatprep.mubr.f32.mxu0 %v506
    %1554 = vmatmul.mubr.f32.gmra.mxu0 %v505
    %v1555 = vpop.f32.mrf.mxu0
    %v1556 = vadd.f32 %v1341, %v1555
    %v1557 = vpop.f32.mrf.mxu0
    %v1558 = vadd.f32 %v1343, %v1557
    %1559 = vmatprep.mubr.f32.mxu0 %v516
    %1560 = vmatmul.mubr.f32.gmra.mxu0 %v515
    %v1561 = vpop.f32.mrf.mxu0
    %v1562 = vadd.f32 %v1347, %v1561
    %v1563 = vpop.f32.mrf.mxu0
    %v1564 = vadd.f32 %v1349, %v1563
    %1565 = vmatprep.mubr.f32.mxu0 %v526
    %1566 = vmatmul.mubr.f32.gmra.mxu0 %v525
    %v1567 = vpop.f32.mrf.mxu0
    %v1568 = vadd.f32 %v1353, %v1567
    %v1569 = vpop.f32.mrf.mxu0
    %v1570 = vadd.f32 %v1355, %v1569
    %1571 = vmatprep.mubr.f32.mxu0 %v536
    %1572 = vmatmul.mubr.f32.gmra.mxu0 %v535
    %v1573 = vpop.f32.mrf.mxu0
    %v1574 = vadd.f32 %v1359, %v1573
    %v1575 = vpop.f32.mrf.mxu0
    %v1576 = vadd.f32 %v1361, %v1575
    %1577 = vmatprep.mubr.f32.mxu0 %v546
    %1578 = vmatmul.mubr.f32.gmra.mxu0 %v545
    %v1579 = vpop.f32.mrf.mxu0
    %v1580 = vadd.f32 %v1365, %v1579
    %v1581 = vpop.f32.mrf.mxu0
    %v1582 = vadd.f32 %v1367, %v1581
    %1583 = vmatprep.mubr.f32.mxu0 %v556
    %1584 = vmatmul.mubr.f32.gmra.mxu0 %v555
    %v1585 = vpop.f32.mrf.mxu0
    %v1586 = vadd.f32 %v1371, %v1585
    %v1587 = vpop.f32.mrf.mxu0
    %v1588 = vadd.f32 %v1373, %v1587
    %1589 = vmatprep.mubr.f32.mxu0 %v566
    %1590 = vmatmul.mubr.f32.gmra.mxu0 %v565
    %v1591 = vpop.f32.mrf.mxu0
    %v1592 = vadd.f32 %v1377, %v1591
    %v1593 = vpop.f32.mrf.mxu0
    %v1594 = vadd.f32 %v1379, %v1593
    %1595 = vmatprep.mubr.f32.mxu0 %v576
    %1596 = vmatmul.mubr.f32.gmra.mxu0 %v575
    %v1597 = vpop.f32.mrf.mxu0
    %v1598 = vadd.f32 %v1383, %v1597
    %v1599 = vpop.f32.mrf.mxu0
    %v1600 = vadd.f32 %v1385, %v1599
    %1601 = vdwg.mxu0
    %1602 = vmatprep.subr.mxu0 %v804
    %1603 = vmatpush1.msra.mxu0 %v803
    %1604 = vmatprep.subr.mxu0 %v802
    %1605 = vmatpush1.msra.mxu0 %v801
    %1606 = vmatprep.subr.mxu0 %v800
    %1607 = vmatpush1.msra.mxu0 %v799
    %1608 = vmatprep.subr.mxu0 %v798
    %1609 = vmatpush1.msra.mxu0 %v797
    %1610 = vmatprep.subr.mxu0 %v796
    %1611 = vmatpush1.msra.mxu0 %v795
    %1612 = vmatprep.subr.mxu0 %v794
    %1613 = vmatpush1.msra.mxu0 %v793
    %1614 = vmatprep.subr.mxu0 %v792
    %1615 = vmatpush1.msra.mxu0 %v791
    %1616 = vmatprep.subr.mxu0 %v790
    %1617 = vmatpush1.msra.mxu0 %v789
    %1618 = vmatprep.subr.mxu0 %v788
    %1619 = vmatpush1.msra.mxu0 %v787
    %1620 = vmatprep.subr.mxu0 %v786
    %1621 = vmatpush1.msra.mxu0 %v785
    %1622 = vmatprep.subr.mxu0 %v784
    %1623 = vmatpush1.msra.mxu0 %v783
    %1624 = vmatprep.subr.mxu0 %v782
    %1625 = vmatpush1.msra.mxu0 %v781
    %1626 = vmatprep.subr.mxu0 %v780
    %1627 = vmatpush1.msra.mxu0 %v779
    %1628 = vmatprep.subr.mxu0 %v778
    %1629 = vmatpush1.msra.mxu0 %v777
    %1630 = vmatprep.subr.mxu0 %v776
    %1631 = vmatpush1.msra.mxu0 %v775
    %1632 = vmatprep.subr.mxu0 %v774
    %1633 = vmatpush1.msra.mxu0 %v773
    %1634 = vmatprep.subr.mxu0 %v836
    %1635 = vmatpush2.msra.mxu0 %v835
    %1636 = vmatprep.subr.mxu0 %v834
    %1637 = vmatpush2.msra.mxu0 %v833
    %1638 = vmatprep.subr.mxu0 %v832
    %1639 = vmatpush2.msra.mxu0 %v831
    %1640 = vmatprep.subr.mxu0 %v830
    %1641 = vmatpush2.msra.mxu0 %v829
    %1642 = vmatprep.subr.mxu0 %v828
    %1643 = vmatpush2.msra.mxu0 %v827
    %1644 = vmatprep.subr.mxu0 %v826
    %1645 = vmatpush2.msra.mxu0 %v825
    %1646 = vmatprep.subr.mxu0 %v824
    %1647 = vmatpush2.msra.mxu0 %v823
    %1648 = vmatprep.subr.mxu0 %v822
    %1649 = vmatpush2.msra.mxu0 %v821
    %1650 = vmatprep.subr.mxu0 %v820
    %1651 = vmatpush2.msra.mxu0 %v819
    %1652 = vmatprep.subr.mxu0 %v818
    %1653 = vmatpush2.msra.mxu0 %v817
    %1654 = vmatprep.subr.mxu0 %v816
    %1655 = vmatpush2.msra.mxu0 %v815
    %1656 = vmatprep.subr.mxu0 %v814
    %1657 = vmatpush2.msra.mxu0 %v813
    %1658 = vmatprep.subr.mxu0 %v812
    %1659 = vmatpush2.msra.mxu0 %v811
    %1660 = vmatprep.subr.mxu0 %v810
    %1661 = vmatpush2.msra.mxu0 %v809
    %1662 = vmatprep.subr.mxu0 %v808
    %1663 = vmatpush2.msra.mxu0 %v807
    %1664 = vmatprep.subr.mxu0 %v806
    %1665 = vmatpush2.msra.mxu0 %v805
    %1666 = vmatprep.mubr.f32.mxu0 %v338
    %1667 = vmatmul.mubr.f32.gmra.mxu0 %v337
    %v1668 = vpop.f32.mrf.mxu0
    %v1669 = vadd.f32 %v1454, %v1668
    %v1670 = vpop.f32.mrf.mxu0
    %v1671 = vadd.f32 %v1456, %v1670
    %1672 = vmatprep.mubr.f32.mxu0 %v348
    %1673 = vmatmul.mubr.f32.gmra.mxu0 %v347
    %v1674 = vpop.f32.mrf.mxu0
    %v1675 = vadd.f32 %v1460, %v1674
    %v1676 = vpop.f32.mrf.mxu0
    %v1677 = vadd.f32 %v1462, %v1676
    %1678 = vmatprep.mubr.f32.mxu0 %v358
    %1679 = vmatmul.mubr.f32.gmra.mxu0 %v357
    %v1680 = vpop.f32.mrf.mxu0
    %v1681 = vadd.f32 %v1466, %v1680
    %v1682 = vpop.f32.mrf.mxu0
    %v1683 = vadd.f32 %v1468, %v1682
    %1684 = vmatprep.mubr.f32.mxu0 %v368
    %1685 = vmatmul.mubr.f32.gmra.mxu0 %v367
    %v1686 = vpop.f32.mrf.mxu0
    %v1687 = vadd.f32 %v1472, %v1686
    %v1688 = vpop.f32.mrf.mxu0
    %v1689 = vadd.f32 %v1474, %v1688
    %1690 = vmatprep.mubr.f32.mxu0 %v378
    %1691 = vmatmul.mubr.f32.gmra.mxu0 %v377
    %v1692 = vpop.f32.mrf.mxu0
    %v1693 = vadd.f32 %v1478, %v1692
    %v1694 = vpop.f32.mrf.mxu0
    %v1695 = vadd.f32 %v1480, %v1694
    %1696 = vmatprep.mubr.f32.mxu0 %v388
    %1697 = vmatmul.mubr.f32.gmra.mxu0 %v387
    %v1698 = vpop.f32.mrf.mxu0
    %v1699 = vadd.f32 %v1484, %v1698
    %v1700 = vpop.f32.mrf.mxu0
    %v1701 = vadd.f32 %v1486, %v1700
    %1702 = vmatprep.mubr.f32.mxu0 %v398
    %1703 = vmatmul.mubr.f32.gmra.mxu0 %v397
    %v1704 = vpop.f32.mrf.mxu0
    %v1705 = vadd.f32 %v1490, %v1704
    %v1706 = vpop.f32.mrf.mxu0
    %v1707 = vadd.f32 %v1492, %v1706
    %1708 = vmatprep.mubr.f32.mxu0 %v408
    %1709 = vmatmul.mubr.f32.gmra.mxu0 %v407
    %v1710 = vpop.f32.mrf.mxu0
    %v1711 = vadd.f32 %v1496, %v1710
    %v1712 = vpop.f32.mrf.mxu0
    %v1713 = vadd.f32 %v1498, %v1712
    %1714 = vmatprep.mubr.f32.mxu0 %v418
    %1715 = vmatmul.mubr.f32.gmra.mxu0 %v417
    %v1716 = vpop.f32.mrf.mxu0
    %v1717 = vadd.f32 %v1502, %v1716
    %v1718 = vpop.f32.mrf.mxu0
    %v1719 = vadd.f32 %v1504, %v1718
    %1720 = vmatprep.mubr.f32.mxu0 %v428
    %1721 = vmatmul.mubr.f32.gmra.mxu0 %v427
    %v1722 = vpop.f32.mrf.mxu0
    %v1723 = vadd.f32 %v1508, %v1722
    %v1724 = vpop.f32.mrf.mxu0
    %v1725 = vadd.f32 %v1510, %v1724
    %1726 = vmatprep.mubr.f32.mxu0 %v438
    %1727 = vmatmul.mubr.f32.gmra.mxu0 %v437
    %v1728 = vpop.f32.mrf.mxu0
    %v1729 = vadd.f32 %v1514, %v1728
    %v1730 = vpop.f32.mrf.mxu0
    %v1731 = vadd.f32 %v1516, %v1730
    %1732 = vmatprep.mubr.f32.mxu0 %v448
    %1733 = vmatmul.mubr.f32.gmra.mxu0 %v447
    %v1734 = vpop.f32.mrf.mxu0
    %v1735 = vadd.f32 %v1520, %v1734
    %v1736 = vpop.f32.mrf.mxu0
    %v1737 = vadd.f32 %v1522, %v1736
    %1738 = vmatprep.mubr.f32.mxu0 %v458
    %1739 = vmatmul.mubr.f32.gmra.mxu0 %v457
    %v1740 = vpop.f32.mrf.mxu0
    %v1741 = vadd.f32 %v1526, %v1740
    %v1742 = vpop.f32.mrf.mxu0
    %v1743 = vadd.f32 %v1528, %v1742
    %1744 = vmatprep.mubr.f32.mxu0 %v468
    %1745 = vmatmul.mubr.f32.gmra.mxu0 %v467
    %v1746 = vpop.f32.mrf.mxu0
    %v1747 = vadd.f32 %v1532, %v1746
    %v1748 = vpop.f32.mrf.mxu0
    %v1749 = vadd.f32 %v1534, %v1748
    %1750 = vmatprep.mubr.f32.mxu0 %v478
    %1751 = vmatmul.mubr.f32.gmra.mxu0 %v477
    %v1752 = vpop.f32.mrf.mxu0
    %v1753 = vadd.f32 %v1538, %v1752
    %v1754 = vpop.f32.mrf.mxu0
    %v1755 = vadd.f32 %v1540, %v1754
    %1756 = vmatprep.mubr.f32.mxu0 %v488
    %1757 = vmatmul.mubr.f32.gmra.mxu0 %v487
    %v1758 = vpop.f32.mrf.mxu0
    %v1759 = vadd.f32 %v1544, %v1758
    %v1760 = vpop.f32.mrf.mxu0
    %v1761 = vadd.f32 %v1546, %v1760
    %1762 = vmatprep.mubr.f32.mxu0 %v498
    %1763 = vmatmul.mubr.f32.gmra.mxu0 %v497
    %v1764 = vpop.f32.mrf.mxu0
    %v1765 = vadd.f32 %v1550, %v1764
    %v1766 = vpop.f32.mrf.mxu0
    %v1767 = vadd.f32 %v1552, %v1766
    %1768 = vmatprep.mubr.f32.mxu0 %v508
    %1769 = vmatmul.mubr.f32.gmra.mxu0 %v507
    %v1770 = vpop.f32.mrf.mxu0
    %v1771 = vadd.f32 %v1556, %v1770
    %v1772 = vpop.f32.mrf.mxu0
    %v1773 = vadd.f32 %v1558, %v1772
    %1774 = vmatprep.mubr.f32.mxu0 %v518
    %1775 = vmatmul.mubr.f32.gmra.mxu0 %v517
    %v1776 = vpop.f32.mrf.mxu0
    %v1777 = vadd.f32 %v1562, %v1776
    %v1778 = vpop.f32.mrf.mxu0
    %v1779 = vadd.f32 %v1564, %v1778
    %1780 = vmatprep.mubr.f32.mxu0 %v528
    %1781 = vmatmul.mubr.f32.gmra.mxu0 %v527
    %v1782 = vpop.f32.mrf.mxu0
    %v1783 = vadd.f32 %v1568, %v1782
    %v1784 = vpop.f32.mrf.mxu0
    %v1785 = vadd.f32 %v1570, %v1784
    %1786 = vmatprep.mubr.f32.mxu0 %v538
    %1787 = vmatmul.mubr.f32.gmra.mxu0 %v537
    %v1788 = vpop.f32.mrf.mxu0
    %v1789 = vadd.f32 %v1574, %v1788
    %v1790 = vpop.f32.mrf.mxu0
    %v1791 = vadd.f32 %v1576, %v1790
    %1792 = vmatprep.mubr.f32.mxu0 %v548
    %1793 = vmatmul.mubr.f32.gmra.mxu0 %v547
    %v1794 = vpop.f32.mrf.mxu0
    %v1795 = vadd.f32 %v1580, %v1794
    %v1796 = vpop.f32.mrf.mxu0
    %v1797 = vadd.f32 %v1582, %v1796
    %1798 = vmatprep.mubr.f32.mxu0 %v558
    %1799 = vmatmul.mubr.f32.gmra.mxu0 %v557
    %v1800 = vpop.f32.mrf.mxu0
    %v1801 = vadd.f32 %v1586, %v1800
    %v1802 = vpop.f32.mrf.mxu0
    %v1803 = vadd.f32 %v1588, %v1802
    %1804 = vmatprep.mubr.f32.mxu0 %v568
    %1805 = vmatmul.mubr.f32.gmra.mxu0 %v567
    %v1806 = vpop.f32.mrf.mxu0
    %v1807 = vadd.f32 %v1592, %v1806
    %v1808 = vpop.f32.mrf.mxu0
    %v1809 = vadd.f32 %v1594, %v1808
    %1810 = vmatprep.mubr.f32.mxu0 %v578
    %1811 = vmatmul.mubr.f32.gmra.mxu0 %v577
    %v1812 = vpop.f32.mrf.mxu0
    %v1813 = vadd.f32 %v1598, %v1812
    %v1814 = vpop.f32.mrf.mxu0
    %v1815 = vadd.f32 %v1600, %v1814
    %1816 = vdwg.mxu0
    %1817 = vmatprep.subr.mxu0 %v868
    %1818 = vmatpush1.msra.mxu0 %v867
    %1819 = vmatprep.subr.mxu0 %v866
    %1820 = vmatpush1.msra.mxu0 %v865
    %1821 = vmatprep.subr.mxu0 %v864
    %1822 = vmatpush1.msra.mxu0 %v863
    %1823 = vmatprep.subr.mxu0 %v862
    %1824 = vmatpush1.msra.mxu0 %v861
    %1825 = vmatprep.subr.mxu0 %v860
    %1826 = vmatpush1.msra.mxu0 %v859
    %1827 = vmatprep.subr.mxu0 %v858
    %1828 = vmatpush1.msra.mxu0 %v857
    %1829 = vmatprep.subr.mxu0 %v856
    %1830 = vmatpush1.msra.mxu0 %v855
    %1831 = vmatprep.subr.mxu0 %v854
    %1832 = vmatpush1.msra.mxu0 %v853
    %1833 = vmatprep.subr.mxu0 %v852
    %1834 = vmatpush1.msra.mxu0 %v851
    %1835 = vmatprep.subr.mxu0 %v850
    %1836 = vmatpush1.msra.mxu0 %v849
    %1837 = vmatprep.subr.mxu0 %v848
    %1838 = vmatpush1.msra.mxu0 %v847
    %1839 = vmatprep.subr.mxu0 %v846
    %1840 = vmatpush1.msra.mxu0 %v845
    %1841 = vmatprep.subr.mxu0 %v844
    %1842 = vmatpush1.msra.mxu0 %v843
    %1843 = vmatprep.subr.mxu0 %v842
    %1844 = vmatpush1.msra.mxu0 %v841
    %1845 = vmatprep.subr.mxu0 %v840
    %1846 = vmatpush1.msra.mxu0 %v839
    %1847 = vmatprep.subr.mxu0 %v838
    %1848 = vmatpush1.msra.mxu0 %v837
    %1849 = vmatprep.subr.mxu0 0.0
    %1850 = vmatpush2.msra.mxu0 0.0
    %1851 = vmatprep.subr.mxu0 0.0
    %1852 = vmatpush2.msra.mxu0 0.0
    %1853 = vmatprep.subr.mxu0 0.0
    %1854 = vmatpush2.msra.mxu0 0.0
    %1855 = vmatprep.subr.mxu0 0.0
    %1856 = vmatpush2.msra.mxu0 0.0
    %1857 = vmatprep.subr.mxu0 0.0
    %1858 = vmatpush2.msra.mxu0 0.0
    %1859 = vmatprep.subr.mxu0 0.0
    %1860 = vmatpush2.msra.mxu0 0.0
    %1861 = vmatprep.subr.mxu0 0.0
    %1862 = vmatpush2.msra.mxu0 0.0
    %1863 = vmatprep.subr.mxu0 0.0
    %1864 = vmatpush2.msra.mxu0 0.0
    %1865 = vmatprep.subr.mxu0 0.0
    %1866 = vmatpush2.msra.mxu0 0.0
    %1867 = vmatprep.subr.mxu0 0.0
    %1868 = vmatpush2.msra.mxu0 0.0
    %1869 = vmatprep.subr.mxu0 %v880
    %1870 = vmatpush2.msra.mxu0 %v879
    %1871 = vmatprep.subr.mxu0 %v878
    %1872 = vmatpush2.msra.mxu0 %v877
    %1873 = vmatprep.subr.mxu0 %v876
    %1874 = vmatpush2.msra.mxu0 %v875
    %1875 = vmatprep.subr.mxu0 %v874
    %1876 = vmatpush2.msra.mxu0 %v873
    %1877 = vmatprep.subr.mxu0 %v872
    %1878 = vmatpush2.msra.mxu0 %v871
    %1879 = vmatprep.subr.mxu0 %v870
    %1880 = vmatpush2.msra.mxu0 %v869
    %1881 = vmatprep.mubr.f32.mxu0 %v883
    %1882 = vmatmul.mubr.f32.gmra.mxu0 %v339
    %v1883 = vpop.f32.mrf.mxu0
    %v1884 = vadd.f32 %v1669, %v1883
    %v1885 = vpop.f32.mrf.mxu0
    %v1886 = vadd.f32 %v1671, %v1885
    %1887 = vmatprep.mubr.f32.mxu0 %v886
    %1888 = vmatmul.mubr.f32.gmra.mxu0 %v349
    %v1889 = vpop.f32.mrf.mxu0
    %v1890 = vadd.f32 %v1675, %v1889
    %v1891 = vpop.f32.mrf.mxu0
    %v1892 = vadd.f32 %v1677, %v1891
    %1893 = vmatprep.mubr.f32.mxu0 %v889
    %1894 = vmatmul.mubr.f32.gmra.mxu0 %v359
    %v1895 = vpop.f32.mrf.mxu0
    %v1896 = vadd.f32 %v1681, %v1895
    %v1897 = vpop.f32.mrf.mxu0
    %v1898 = vadd.f32 %v1683, %v1897
    %1899 = vmatprep.mubr.f32.mxu0 %v892
    %1900 = vmatmul.mubr.f32.gmra.mxu0 %v369
    %v1901 = vpop.f32.mrf.mxu0
    %v1902 = vadd.f32 %v1687, %v1901
    %v1903 = vpop.f32.mrf.mxu0
    %v1904 = vadd.f32 %v1689, %v1903
    %1905 = vmatprep.mubr.f32.mxu0 %v895
    %1906 = vmatmul.mubr.f32.gmra.mxu0 %v379
    %v1907 = vpop.f32.mrf.mxu0
    %v1908 = vadd.f32 %v1693, %v1907
    %v1909 = vpop.f32.mrf.mxu0
    %v1910 = vadd.f32 %v1695, %v1909
    %1911 = vmatprep.mubr.f32.mxu0 %v898
    %1912 = vmatmul.mubr.f32.gmra.mxu0 %v389
    %v1913 = vpop.f32.mrf.mxu0
    %v1914 = vadd.f32 %v1699, %v1913
    %v1915 = vpop.f32.mrf.mxu0
    %v1916 = vadd.f32 %v1701, %v1915
    %1917 = vmatprep.mubr.f32.mxu0 %v901
    %1918 = vmatmul.mubr.f32.gmra.mxu0 %v399
    %v1919 = vpop.f32.mrf.mxu0
    %v1920 = vadd.f32 %v1705, %v1919
    %v1921 = vpop.f32.mrf.mxu0
    %v1922 = vadd.f32 %v1707, %v1921
    %1923 = vmatprep.mubr.f32.mxu0 %v904
    %1924 = vmatmul.mubr.f32.gmra.mxu0 %v409
    %v1925 = vpop.f32.mrf.mxu0
    %v1926 = vadd.f32 %v1711, %v1925
    %v1927 = vpop.f32.mrf.mxu0
    %v1928 = vadd.f32 %v1713, %v1927
    %1929 = vmatprep.mubr.f32.mxu0 %v907
    %1930 = vmatmul.mubr.f32.gmra.mxu0 %v419
    %v1931 = vpop.f32.mrf.mxu0
    %v1932 = vadd.f32 %v1717, %v1931
    %v1933 = vpop.f32.mrf.mxu0
    %v1934 = vadd.f32 %v1719, %v1933
    %1935 = vmatprep.mubr.f32.mxu0 %v910
    %1936 = vmatmul.mubr.f32.gmra.mxu0 %v429
    %v1937 = vpop.f32.mrf.mxu0
    %v1938 = vadd.f32 %v1723, %v1937
    %v1939 = vpop.f32.mrf.mxu0
    %v1940 = vadd.f32 %v1725, %v1939
    %1941 = vmatprep.mubr.f32.mxu0 %v913
    %1942 = vmatmul.mubr.f32.gmra.mxu0 %v439
    %v1943 = vpop.f32.mrf.mxu0
    %v1944 = vadd.f32 %v1729, %v1943
    %v1945 = vpop.f32.mrf.mxu0
    %v1946 = vadd.f32 %v1731, %v1945
    %1947 = vmatprep.mubr.f32.mxu0 %v916
    %1948 = vmatmul.mubr.f32.gmra.mxu0 %v449
    %v1949 = vpop.f32.mrf.mxu0
    %v1950 = vadd.f32 %v1735, %v1949
    %v1951 = vpop.f32.mrf.mxu0
    %v1952 = vadd.f32 %v1737, %v1951
    %1953 = vmatprep.mubr.f32.mxu0 %v919
    %1954 = vmatmul.mubr.f32.gmra.mxu0 %v459
    %v1955 = vpop.f32.mrf.mxu0
    %v1956 = vadd.f32 %v1741, %v1955
    %v1957 = vpop.f32.mrf.mxu0
    %v1958 = vadd.f32 %v1743, %v1957
    %1959 = vmatprep.mubr.f32.mxu0 %v922
    %1960 = vmatmul.mubr.f32.gmra.mxu0 %v469
    %v1961 = vpop.f32.mrf.mxu0
    %v1962 = vadd.f32 %v1747, %v1961
    %v1963 = vpop.f32.mrf.mxu0
    %v1964 = vadd.f32 %v1749, %v1963
    %1965 = vmatprep.mubr.f32.mxu0 %v925
    %1966 = vmatmul.mubr.f32.gmra.mxu0 %v479
    %v1967 = vpop.f32.mrf.mxu0
    %v1968 = vadd.f32 %v1753, %v1967
    %v1969 = vpop.f32.mrf.mxu0
    %v1970 = vadd.f32 %v1755, %v1969
    %1971 = vmatprep.mubr.f32.mxu0 %v928
    %1972 = vmatmul.mubr.f32.gmra.mxu0 %v489
    %v1973 = vpop.f32.mrf.mxu0
    %v1974 = vadd.f32 %v1759, %v1973
    %v1975 = vpop.f32.mrf.mxu0
    %v1976 = vadd.f32 %v1761, %v1975
    %1977 = vmatprep.mubr.f32.mxu0 %v931
    %1978 = vmatmul.mubr.f32.gmra.mxu0 %v499
    %v1979 = vpop.f32.mrf.mxu0
    %v1980 = vadd.f32 %v1765, %v1979
    %v1981 = vpop.f32.mrf.mxu0
    %v1982 = vadd.f32 %v1767, %v1981
    %1983 = vmatprep.mubr.f32.mxu0 %v934
    %1984 = vmatmul.mubr.f32.gmra.mxu0 %v509
    %v1985 = vpop.f32.mrf.mxu0
    %v1986 = vadd.f32 %v1771, %v1985
    %v1987 = vpop.f32.mrf.mxu0
    %v1988 = vadd.f32 %v1773, %v1987
    %1989 = vmatprep.mubr.f32.mxu0 %v937
    %1990 = vmatmul.mubr.f32.gmra.mxu0 %v519
    %v1991 = vpop.f32.mrf.mxu0
    %v1992 = vadd.f32 %v1777, %v1991
    %v1993 = vpop.f32.mrf.mxu0
    %v1994 = vadd.f32 %v1779, %v1993
    %1995 = vmatprep.mubr.f32.mxu0 %v940
    %1996 = vmatmul.mubr.f32.gmra.mxu0 %v529
    %v1997 = vpop.f32.mrf.mxu0
    %v1998 = vadd.f32 %v1783, %v1997
    %v1999 = vpop.f32.mrf.mxu0
    %v2000 = vadd.f32 %v1785, %v1999
    %2001 = vmatprep.mubr.f32.mxu0 %v943
    %2002 = vmatmul.mubr.f32.gmra.mxu0 %v539
    %v2003 = vpop.f32.mrf.mxu0
    %v2004 = vadd.f32 %v1789, %v2003
    %v2005 = vpop.f32.mrf.mxu0
    %v2006 = vadd.f32 %v1791, %v2005
    %2007 = vmatprep.mubr.f32.mxu0 %v946
    %2008 = vmatmul.mubr.f32.gmra.mxu0 %v549
    %v2009 = vpop.f32.mrf.mxu0
    %v2010 = vadd.f32 %v1795, %v2009
    %v2011 = vpop.f32.mrf.mxu0
    %v2012 = vadd.f32 %v1797, %v2011
    %2013 = vmatprep.mubr.f32.mxu0 %v949
    %2014 = vmatmul.mubr.f32.gmra.mxu0 %v559
    %v2015 = vpop.f32.mrf.mxu0
    %v2016 = vadd.f32 %v1801, %v2015
    %v2017 = vpop.f32.mrf.mxu0
    %v2018 = vadd.f32 %v1803, %v2017
    %2019 = vmatprep.mubr.f32.mxu0 %v952
    %2020 = vmatmul.mubr.f32.gmra.mxu0 %v569
    %v2021 = vpop.f32.mrf.mxu0
    %v2022 = vadd.f32 %v1807, %v2021
    %v2023 = vpop.f32.mrf.mxu0
    %v2024 = vadd.f32 %v1809, %v2023
    %2025 = vmatprep.mubr.f32.mxu0 %v955
    %2026 = vmatmul.mubr.f32.gmra.mxu0 %v579
    %v2027 = vpop.f32.mrf.mxu0
    %v2028 = vadd.f32 %v1813, %v2027
    %v2029 = vpop.f32.mrf.mxu0
    %v2030 = vadd.f32 %v1815, %v2029
    %2031 = vdwg.mxu0
    %2032 = vst [vmem:[#allocation2] sm:$0xff] %v1884
    %vm2033 = vcmask 556032
    %2034 = vst.msk [vmem:[#allocation2 + $0x8] sm:$0xff] %vm2033, %v1886
    %2035 = vst [vmem:[#allocation2 + $0x10] sm:$0xff] %v1890
    %2036 = vst.msk [vmem:[#allocation2 + $0x18] sm:$0xff] %vm2033, %v1892
    %2037 = vst [vmem:[#allocation2 + $0x20] sm:$0xff] %v1896
    %2038 = vst.msk [vmem:[#allocation2 + $0x28] sm:$0xff] %vm2033, %v1898
    %2039 = vst [vmem:[#allocation2 + $0x30] sm:$0xff] %v1902
    %2040 = vst.msk [vmem:[#allocation2 + $0x38] sm:$0xff] %vm2033, %v1904
    %2041 = vst [vmem:[#allocation2 + $0x40] sm:$0xff] %v1908
    %2042 = vst.msk [vmem:[#allocation2 + $0x48] sm:$0xff] %vm2033, %v1910
    %2043 = vst [vmem:[#allocation2 + $0x50] sm:$0xff] %v1914
    %2044 = vst.msk [vmem:[#allocation2 + $0x58] sm:$0xff] %vm2033, %v1916
    %2045 = vst [vmem:[#allocation2 + $0x60] sm:$0xff] %v1920
    %2046 = vst.msk [vmem:[#allocation2 + $0x68] sm:$0xff] %vm2033, %v1922
    %2047 = vst [vmem:[#allocation2 + $0x70] sm:$0xff] %v1926
    %2048 = vst.msk [vmem:[#allocation2 + $0x78] sm:$0xff] %vm2033, %v1928
    %2049 = vst [vmem:[#allocation2 + $0x80] sm:$0xff] %v1932
    %2050 = vst.msk [vmem:[#allocation2 + $0x88] sm:$0xff] %vm2033, %v1934
    %2051 = vst [vmem:[#allocation2 + $0x90] sm:$0xff] %v1938
    %2052 = vst.msk [vmem:[#allocation2 + $0x98] sm:$0xff] %vm2033, %v1940
    %2053 = vst [vmem:[#allocation2 + $0xa0] sm:$0xff] %v1944
    %2054 = vst.msk [vmem:[#allocation2 + $0xa8] sm:$0xff] %vm2033, %v1946
    %2055 = vst [vmem:[#allocation2 + $0xb0] sm:$0xff] %v1950
    %2056 = vst.msk [vmem:[#allocation2 + $0xb8] sm:$0xff] %vm2033, %v1952
    %2057 = vst [vmem:[#allocation2 + $0xc0] sm:$0xff] %v1956
    %2058 = vst.msk [vmem:[#allocation2 + $0xc8] sm:$0xff] %vm2033, %v1958
    %2059 = vst [vmem:[#allocation2 + $0xd0] sm:$0xff] %v1962
    %2060 = vst.msk [vmem:[#allocation2 + $0xd8] sm:$0xff] %vm2033, %v1964
    %2061 = vst [vmem:[#allocation2 + $0xe0] sm:$0xff] %v1968
    %2062 = vst.msk [vmem:[#allocation2 + $0xe8] sm:$0xff] %vm2033, %v1970
    %2063 = vst [vmem:[#allocation2 + $0xf0] sm:$0xff] %v1974
    %2064 = vst.msk [vmem:[#allocation2 + $0xf8] sm:$0xff] %vm2033, %v1976
    %2065 = vst [vmem:[#allocation2 + $0x100] sm:$0xff] %v1980
    %2066 = vst.msk [vmem:[#allocation2 + $0x108] sm:$0xff] %vm2033, %v1982
    %2067 = vst [vmem:[#allocation2 + $0x110] sm:$0xff] %v1986
    %2068 = vst.msk [vmem:[#allocation2 + $0x118] sm:$0xff] %vm2033, %v1988
    %2069 = vst [vmem:[#allocation2 + $0x120] sm:$0xff] %v1992
    %2070 = vst.msk [vmem:[#allocation2 + $0x128] sm:$0xff] %vm2033, %v1994
    %2071 = vst [vmem:[#allocation2 + $0x130] sm:$0xff] %v1998
    %2072 = vst.msk [vmem:[#allocation2 + $0x138] sm:$0xff] %vm2033, %v2000
    %2073 = vst [vmem:[#allocation2 + $0x140] sm:$0xff] %v2004
    %2074 = vst.msk [vmem:[#allocation2 + $0x148] sm:$0xff] %vm2033, %v2006
    %2075 = vst [vmem:[#allocation2 + $0x150] sm:$0xff] %v2010
    %2076 = vst.msk [vmem:[#allocation2 + $0x158] sm:$0xff] %vm2033, %v2012
    %2077 = vst [vmem:[#allocation2 + $0x160] sm:$0xff] %v2016
    %2078 = vst.msk [vmem:[#allocation2 + $0x168] sm:$0xff] %vm2033, %v2018
    %2079 = vst [vmem:[#allocation2 + $0x170] sm:$0xff] %v2022
    %2080 = vst.msk [vmem:[#allocation2 + $0x178] sm:$0xff] %vm2033, %v2024
    %2081 = vst [vmem:[#allocation2 + $0x180] sm:$0xff] %v2028
    %2082 = vst.msk [vmem:[#allocation2 + $0x188] sm:$0xff] %vm2033, %v2030
    // Predicated region
    $region14: #{tpu_custom_call.1} parent=1 // pred_check
      _
    $region15: #{tpu_custom_call.1} parent=1 // pred_check_branch
      %2084 = sbr.rel (0) target = $region17
    $region16: #{tpu_custom_call.1} parent=1 // pred_region
      %s2086 = ssub.s32 6400, 6400
      %2087 = vsyncadd [#allocation3], %s2086
      %s2088 = sshll.u32 [#allocation2], 4
      %s2089 = int_to_ptr.vmem [resolvable:$true] %s2088
      %2094 = dma.vmem_to_hbm [thread:$0]  %s2089, 6400, %s3, [#allocation3], 256, 256, 16
    $region17: #{tpu_custom_call.1} parent=1 // pred_fallthru
      _
    // Predicated region
    $region18: #{tpu_custom_call.1} parent=1 // pred_check
      _
    $region19: #{tpu_custom_call.1} parent=1 // pred_check_branch
      %2096 = sbr.rel (0) target = $region21
    $region20: #{tpu_custom_call.1} parent=1 // pred_region
      %2097 = dma.done [#allocation3], 6400
    $region21: #{tpu_custom_call.1} parent=1 // pred_fallthru
      _
    %2098 = vsyncpa [#allocation3], 1

</llo_original>
